<compile_context>
chip_gen: v7x
topology: tpu7x:2x2x1
jax: 0.10.0
libtpu: 0.0.40
codegen_flags: <defaults>
</compile_context>

<pallas_src>
import functools

import jax
import jax.numpy as jnp
from jax.experimental import pallas as pl
from jax.experimental.pallas import tpu as pltpu


def fnn_kernel(idx_ref, w1e_ref, b1_ref, w2_ref, b2_ref, out_ref):
    """One batch tile of the full forward pass.

    idx_ref : (TB, C)    int32  raw token ids
    w1e_ref : (C*V, H)   bf16   fused (embedding @ linear1) weight (precomputed)
    b1_ref  : (1, H)     f32    linear1 bias
    w2_ref  : (H, V)     bf16   linear2 weight (input-major)
    b2_ref  : (1, V)     f32    linear2 bias
    out_ref : (TB, V)           log_probs
    """
    idx = idx_ref[...]                               # (TB, C) int32
    TB, C = idx.shape
    H = w1e_ref.shape[1]
    V = w2_ref.shape[1]

    # One (TB, V) lane iota shared by all C per-position compares.
    lane = jax.lax.broadcasted_iota(jnp.int32, (TB, V), 1)

    # Fused embedding + linear1: per context position build a small (TB, V)
    # bf16 one-hot and accumulate a matmul against the static row slice of the
    # precomputed W1e.  K = V = 256 per MXU pass; accumulation in f32.
    acc = jnp.zeros((TB, H), jnp.float32)
    for c in range(C):
        onehot_c = (lane == idx[:, c:c + 1]).astype(jnp.bfloat16)   # (TB, V)
        acc = acc + jnp.dot(onehot_c, w1e_ref[c * V:(c + 1) * V, :],
                            preferred_element_type=jnp.float32)

    hidden = jnp.maximum(acc + b1_ref[...], 0.0)                    # ReLU, f32

    # linear2 (bf16 operands, f32 accumulate).
    logits = jnp.dot(hidden.astype(jnp.bfloat16), w2_ref[...],
                     preferred_element_type=jnp.float32) + b2_ref[...]  # (TB, V)

    # Numerically stable log_softmax over dim=1, in f32.
    m = jnp.max(logits, axis=1, keepdims=True)
    lse = m + jnp.log(jnp.sum(jnp.exp(logits - m), axis=1, keepdims=True))
    out_ref[...] = (logits - lse).astype(out_ref.dtype)


def prepare_params(emb, w1, b1, w2, b2):
    """One-time fold of the embedding table into linear1.

    Call once (weights are static at inference) and reuse the result; do NOT
    call per forward step -- re-running this fold every call costs as much as
    the whole kernel.  W1e[c*V + v, :] = emb[v, :] @ W1[c*E:(c+1)*E, :].
    """
    V, E = emb.shape
    CE, H = w1.shape
    C = CE // E
    w1e = jnp.einsum("ve,ceh->cvh", emb.astype(jnp.float32),
                     w1.astype(jnp.float32).reshape(C, E, H)).reshape(C * V, H)
    return (w1e.astype(jnp.bfloat16),
            b1.astype(jnp.float32).reshape(1, H),
            w2.astype(jnp.bfloat16),
            b2.astype(jnp.float32).reshape(1, V))


def _pick_tile_b(batch):
    """Batch tile: one tile for B <= 1024 (single-TC v5e/v6e: weights fetched
    once, minimal per-step overhead); ~512-row tiles for larger B so dual-TC
    v7x can shard the "parallel" batch grid with small per-tile VMEM."""
    if batch <= 1024:
        return batch
    for t in (512, 1024, 256, 128, 64, 32, 16, 8):
        if batch % t == 0:
            return t
    return batch   # ragged batch: fall back to a single full-batch tile


@functools.partial(jax.jit, static_argnames=("tile_b", "out_dtype"))
def fnn_forward(inputs, w1e, b1, w2, b2, *, tile_b=None, out_dtype=jnp.float32):
    """inputs: (B, C) int32 token ids.  w1e/b1/w2/b2 come from prepare_params()."""
    B, C = inputs.shape
    KV, H = w1e.shape
    V = w2.shape[1]
    assert KV == C * V, "w1e must be the (C*V, H) fused embedding/linear1 weight"

    if tile_b is None:
        tile_b = _pick_tile_b(B)
    assert B % tile_b == 0, "batch must be divisible by the batch tile"

    idx = inputs.astype(jnp.int32)
    grid = (B // tile_b,)

    return pl.pallas_call(
        fnn_kernel,
        out_shape=jax.ShapeDtypeStruct((B, V), out_dtype),
        grid_spec=pltpu.PrefetchScalarGridSpec(
            num_scalar_prefetch=0,
            grid=grid,
            in_specs=[
                pl.BlockSpec((tile_b, C), lambda i: (i, 0)),   # token ids
                pl.BlockSpec((KV, H), lambda i: (0, 0)),       # fused W1e (bf16)
                pl.BlockSpec((1, H), lambda i: (0, 0)),        # b1 (f32)
                pl.BlockSpec((H, V), lambda i: (0, 0)),        # W2 (bf16)
                pl.BlockSpec((1, V), lambda i: (0, 0)),        # b2 (f32)
            ],
            out_specs=pl.BlockSpec((tile_b, V), lambda i: (i, 0)),
        ),
        compiler_params=pltpu.CompilerParams(
            dimension_semantics=("parallel",)),   # shards batch tiles on v7x
    )(idx, w1e, b1, w2, b2)


def reference_forward(inputs, emb, w1, b1, w2, b2):
    """Straightforward f32 reference matching the PyTorch module."""
    embeds = emb[inputs].reshape(inputs.shape[0], -1)
    hidden = jnp.maximum(embeds @ w1 + b1, 0.0)
    logits = hidden @ w2 + b2
    return jax.nn.log_softmax(logits, axis=1)


if __name__ == "__main__":
    # Module-fixed shapes: context_size=3, embedding_dim=128, hidden_dim=256.
    context_size = 3
    embedding_dim = 128
    hidden_dim = 256
    vocab_size = 256
    batch = 128                     # small demo batch -> grid=(1,), one tile

    key = jax.random.PRNGKey(0)
    k_idx, k_emb, k_w1, k_b1, k_w2, k_b2 = jax.random.split(key, 6)

    inputs = jax.random.randint(
        k_idx, (batch, context_size), 0, vocab_size, dtype=jnp.int32)

    # Deterministic parameter init (shapes from FNN.__init__, input-major).
    emb = jax.random.normal(k_emb, (vocab_size, embedding_dim), jnp.float32)
    s1 = 1.0 / jnp.sqrt(context_size * embedding_dim)
    w1 = jax.random.uniform(k_w1, (context_size * embedding_dim, hidden_dim),
                            jnp.float32, -s1, s1)
    b1 = jax.random.uniform(k_b1, (hidden_dim,), jnp.float32, -s1, s1)
    s2 = 1.0 / jnp.sqrt(hidden_dim)
    w2 = jax.random.uniform(k_w2, (hidden_dim, vocab_size),
                            jnp.float32, -s2, s2)
    b2 = jax.random.uniform(k_b2, (vocab_size,), jnp.float32, -s2, s2)

    # One-time weight preparation, hoisted OUT of the per-call path.
    w1e, b1r, w2b, b2r = jax.block_until_ready(
        prepare_params(emb, w1, b1, w2, b2))

    out = fnn_forward(inputs, w1e, b1r, w2b, b2r)
    out = jax.block_until_ready(out)

    ref = reference_forward(inputs, emb, w1, b1, w2, b2)
    assert out.shape == (batch, vocab_size)
    # Tolerance accounts for bf16 matmul operands (f32 accumulation).
    assert jnp.allclose(out, ref, rtol=1e-2, atol=1e-2), "mismatch vs reference"

    print("KERNEL_OK")
</pallas_src>

<mosaic_0001>
module attributes {stable_mosaic.version = 11 : i64} {
  func.func @fnn_kernel(%arg0: i32, %arg1: memref<128x3xi32, #tpu.memory_space<vmem>>, %arg2: memref<768x256xbf16, #tpu.memory_space<vmem>>, %arg3: memref<1x256xf32, #tpu.memory_space<vmem>>, %arg4: memref<256x256xbf16, #tpu.memory_space<vmem>>, %arg5: memref<1x256xf32, #tpu.memory_space<vmem>>, %arg6: memref<128x256xf32, #tpu.memory_space<vmem>>) attributes {dimension_semantics = [#tpu.dimension_semantics<parallel>], iteration_bounds = array<i64: 1>, scalar_prefetch = 0 : i64, scratch_operands = 0 : i64, tpu.core_type = #tpu.core_type<tc>, window_params = [{transform_indices = @transform_0, window_bounds = array<i64: 128, 3>}, {pipeline_mode = #tpu.pipeline_mode<synchronous>, transform_indices = @transform_1, window_bounds = array<i64: 768, 256>}, {pipeline_mode = #tpu.pipeline_mode<synchronous>, transform_indices = @transform_2, window_bounds = array<i64: 1, 256>}, {pipeline_mode = #tpu.pipeline_mode<synchronous>, transform_indices = @transform_3, window_bounds = array<i64: 256, 256>}, {pipeline_mode = #tpu.pipeline_mode<synchronous>, transform_indices = @transform_4, window_bounds = array<i64: 1, 256>}, {transform_indices = @transform_5, window_bounds = array<i64: 128, 256>}]} {
    %c0 = arith.constant 0 : index
    %c0_0 = arith.constant 0 : index
    %0 = vector.load %arg1[%c0, %c0_0] : memref<128x3xi32, #tpu.memory_space<vmem>>, vector<128x3xi32>
    %1 = tpu.iota {dimensions = array<i32: 1>} : vector<128x256xi32>
    %cst = arith.constant 0.000000e+00 : f32
    %2 = vector.broadcast %cst : f32 to vector<128x256xf32>
    %3 = vector.extract_strided_slice %0 {offsets = [0, 0], sizes = [128, 1], strides = [1, 1]} : vector<128x3xi32> to vector<128x1xi32>
    %4 = vector.broadcast %3 : vector<128x1xi32> to vector<128x256xi32>
    %5 = arith.cmpi eq, %1, %4 : vector<128x256xi32>
    %6 = arith.extui %5 : vector<128x256xi1> to vector<128x256xi32>
    %7 = arith.sitofp %6 : vector<128x256xi32> to vector<128x256xf32>
    %8 = arith.truncf %7 : vector<128x256xf32> to vector<128x256xbf16>
    %c0_1 = arith.constant 0 : index
    %c0_2 = arith.constant 0 : index
    %9 = vector.load %arg2[%c0_1, %c0_2] : memref<768x256xbf16, #tpu.memory_space<vmem>>, vector<256x256xbf16>
    %cst_3 = arith.constant dense<0.000000e+00> : vector<128x256xf32>
    %10 = tpu.matmul %8, %9, %cst_3 {dimension_numbers = #tpu.dot_dimension_numbers<[1], [0], [0], [1], [0, 0, 1, 1], [], []>} : vector<128x256xbf16>, vector<256x256xbf16>, vector<128x256xf32> -> vector<128x256xf32>
    %11 = arith.addf %2, %10 : vector<128x256xf32>
    %12 = vector.extract_strided_slice %0 {offsets = [0, 1], sizes = [128, 1], strides = [1, 1]} : vector<128x3xi32> to vector<128x1xi32>
    %13 = vector.broadcast %12 : vector<128x1xi32> to vector<128x256xi32>
    %14 = arith.cmpi eq, %1, %13 : vector<128x256xi32>
    %15 = arith.extui %14 : vector<128x256xi1> to vector<128x256xi32>
    %16 = arith.sitofp %15 : vector<128x256xi32> to vector<128x256xf32>
    %17 = arith.truncf %16 : vector<128x256xf32> to vector<128x256xbf16>
    %c256 = arith.constant 256 : index
    %c0_4 = arith.constant 0 : index
    %18 = vector.load %arg2[%c256, %c0_4] : memref<768x256xbf16, #tpu.memory_space<vmem>>, vector<256x256xbf16>
    %cst_5 = arith.constant dense<0.000000e+00> : vector<128x256xf32>
    %19 = tpu.matmul %17, %18, %cst_5 {dimension_numbers = #tpu.dot_dimension_numbers<[1], [0], [0], [1], [0, 0, 1, 1], [], []>} : vector<128x256xbf16>, vector<256x256xbf16>, vector<128x256xf32> -> vector<128x256xf32>
    %20 = arith.addf %11, %19 : vector<128x256xf32>
    %21 = vector.extract_strided_slice %0 {offsets = [0, 2], sizes = [128, 1], strides = [1, 1]} : vector<128x3xi32> to vector<128x1xi32>
    %22 = vector.broadcast %21 : vector<128x1xi32> to vector<128x256xi32>
    %23 = arith.cmpi eq, %1, %22 : vector<128x256xi32>
    %24 = arith.extui %23 : vector<128x256xi1> to vector<128x256xi32>
    %25 = arith.sitofp %24 : vector<128x256xi32> to vector<128x256xf32>
    %26 = arith.truncf %25 : vector<128x256xf32> to vector<128x256xbf16>
    %c512 = arith.constant 512 : index
    %c0_6 = arith.constant 0 : index
    %27 = vector.load %arg2[%c512, %c0_6] : memref<768x256xbf16, #tpu.memory_space<vmem>>, vector<256x256xbf16>
    %cst_7 = arith.constant dense<0.000000e+00> : vector<128x256xf32>
    %28 = tpu.matmul %26, %27, %cst_7 {dimension_numbers = #tpu.dot_dimension_numbers<[1], [0], [0], [1], [0, 0, 1, 1], [], []>} : vector<128x256xbf16>, vector<256x256xbf16>, vector<128x256xf32> -> vector<128x256xf32>
    %29 = arith.addf %20, %28 : vector<128x256xf32>
    %c0_8 = arith.constant 0 : index
    %c0_9 = arith.constant 0 : index
    %30 = vector.load %arg3[%c0_8, %c0_9] : memref<1x256xf32, #tpu.memory_space<vmem>>, vector<1x256xf32>
    %31 = vector.broadcast %30 : vector<1x256xf32> to vector<128x256xf32>
    %32 = arith.addf %29, %31 : vector<128x256xf32>
    %cst_10 = arith.constant 0.000000e+00 : f32
    %33 = vector.broadcast %cst_10 : f32 to vector<128x256xf32>
    %34 = arith.maximumf %32, %33 : vector<128x256xf32>
    %35 = arith.truncf %34 : vector<128x256xf32> to vector<128x256xbf16>
    %c0_11 = arith.constant 0 : index
    %c0_12 = arith.constant 0 : index
    %36 = vector.load %arg4[%c0_11, %c0_12] : memref<256x256xbf16, #tpu.memory_space<vmem>>, vector<256x256xbf16>
    %cst_13 = arith.constant dense<0.000000e+00> : vector<128x256xf32>
    %37 = tpu.matmul %35, %36, %cst_13 {dimension_numbers = #tpu.dot_dimension_numbers<[1], [0], [0], [1], [0, 0, 1, 1], [], []>} : vector<128x256xbf16>, vector<256x256xbf16>, vector<128x256xf32> -> vector<128x256xf32>
    %c0_14 = arith.constant 0 : index
    %c0_15 = arith.constant 0 : index
    %38 = vector.load %arg5[%c0_14, %c0_15] : memref<1x256xf32, #tpu.memory_space<vmem>>, vector<1x256xf32>
    %39 = vector.broadcast %38 : vector<1x256xf32> to vector<128x256xf32>
    %40 = arith.addf %37, %39 : vector<128x256xf32>
    %cst_16 = arith.constant dense<0xFF800000> : vector<128xf32>
    %41 = vector.multi_reduction <maximumf>, %40, %cst_16 [1] : vector<128x256xf32> to vector<128xf32>
    %42 = vector.shape_cast %41 : vector<128xf32> to vector<128x1xf32>
    %43 = vector.broadcast %42 : vector<128x1xf32> to vector<128x256xf32>
    %44 = arith.subf %40, %43 : vector<128x256xf32>
    %45 = math.exp %44 : vector<128x256xf32>
    %cst_17 = arith.constant dense<0.000000e+00> : vector<128xf32>
    %46 = vector.multi_reduction <add>, %45, %cst_17 [1] : vector<128x256xf32> to vector<128xf32>
    %47 = vector.shape_cast %46 : vector<128xf32> to vector<128x1xf32>
    %48 = math.log %47 : vector<128x1xf32>
    %49 = arith.addf %42, %48 : vector<128x1xf32>
    %50 = vector.broadcast %49 : vector<128x1xf32> to vector<128x256xf32>
    %51 = arith.subf %40, %50 : vector<128x256xf32>
    %c0_18 = arith.constant 0 : index
    %c0_19 = arith.constant 0 : index
    %52 = vector.load %arg6[%c0_18, %c0_19] : memref<128x256xf32, #tpu.memory_space<vmem>>, vector<128x256xf32>
    tpu.vector_store %arg6[%c0_18, %c0_19], %51 {strides = array<i32>} : memref<128x256xf32, #tpu.memory_space<vmem>>, vector<128x256xf32>,
    return
  }
  func.func @transform_0(%arg0: i32) -> (i32, i32) {
    %c0_i32 = arith.constant 0 : i32
    %c0_i32_0 = arith.constant 0 : i32
    return %arg0, %c0_i32 : i32, i32
  }
  func.func @transform_1(%arg0: i32) -> (i32, i32) {
    %c0_i32 = arith.constant 0 : i32
    %c0_i32_0 = arith.constant 0 : i32
    %c0_i32_1 = arith.constant 0 : i32
    return %c0_i32, %c0_i32_0 : i32, i32
  }
  func.func @transform_2(%arg0: i32) -> (i32, i32) {
    %c0_i32 = arith.constant 0 : i32
    %c0_i32_0 = arith.constant 0 : i32
    %c0_i32_1 = arith.constant 0 : i32
    return %c0_i32, %c0_i32_0 : i32, i32
  }
  func.func @transform_3(%arg0: i32) -> (i32, i32) {
    %c0_i32 = arith.constant 0 : i32
    %c0_i32_0 = arith.constant 0 : i32
    %c0_i32_1 = arith.constant 0 : i32
    return %c0_i32, %c0_i32_0 : i32, i32
  }
  func.func @transform_4(%arg0: i32) -> (i32, i32) {
    %c0_i32 = arith.constant 0 : i32
    %c0_i32_0 = arith.constant 0 : i32
    %c0_i32_1 = arith.constant 0 : i32
    return %c0_i32, %c0_i32_0 : i32, i32
  }
  func.func @transform_5(%arg0: i32) -> (i32, i32) {
    %c0_i32 = arith.constant 0 : i32
    %c0_i32_0 = arith.constant 0 : i32
    return %arg0, %c0_i32 : i32, i32
  }
}

</mosaic_0001>

<llo_original>
// kernel: fnn_forward.1
$region0: #{fnn_forward.1}
  #allocation0 [shape = 'u32[]', space=smem, size = 0x4, offset = 0x4, fixed_abs, tag = 'smem constant byte address 0x4 - core index']
  #allocation1 [shape = 'u32[144,128]{1,0:T(1,128)}', space=vmem, size = 0x12000, scoped, tag = 'internal scratch']
  %s0 = inlined_call_operand.vmem [shape: s32[128,3], index: 0, kind: input, shape index: {}]
  %s1 = inlined_call_operand.hbm [shape: bf16[768,256], index: 1, kind: input, shape index: {}]
  %s2 = inlined_call_operand.vmem [shape: f32[1,256], index: 2, kind: input, shape index: {}]
  %s3 = inlined_call_operand.hbm [shape: bf16[256,256], index: 3, kind: input, shape index: {}]
  %s4 = inlined_call_operand.vmem [shape: f32[1,256], index: 4, kind: input, shape index: {}]
  %s5 = inlined_call_operand.hbm [shape: f32[128,256], index: 5, kind: output, shape index: {}]
  %s6 = sld [smem:[#allocation0]]
  $region38: #{fnn_forward.1} parent=0
    _
  %s8 = ssub.s32 1, %s6
  %s9 = scalar_select 0, %s8, %s6
  $region1: #{fnn_forward.1} parent=0
    #allocation2 [shape = 'u8[393216]{0}', space=vmem, size = 0x60000, scoped, tag = 'input window, operand 1, single buffered']
    #allocation3 [shape = 's32[1]{0}', space=sflag, size = 0x4, scoped, tag = 'scoped memory for fnn_forward.1']
    #allocation4 [shape = 's32[1]{0}', space=sflag, size = 0x4, scoped, tag = 'scoped memory for fnn_forward.1']
    #allocation5 [shape = 'u8[131072]{0}', space=vmem, size = 0x20000, scoped, tag = 'input window, operand 3, single buffered']
    #allocation6 [shape = 's32[1]{0}', space=sflag, size = 0x4, scoped, tag = 'scoped memory for fnn_forward.1']
    #allocation7 [shape = 'u8[131072]{0}', space=vmem, size = 0x20000, scoped, tag = 'output window, operand 0, single buffered']
    %10 = vsyncpa [#allocation3], 0
    %11 = vsyncpa [#allocation6], 0
    %12 = vsyncpa [#allocation4], 0
    // Predicated region
    $region2: #{fnn_forward.1} parent=1 // pred_check
      _
    $region3: #{fnn_forward.1} parent=1 // pred_check_branch
      %14 = sbr.rel (0) target = $region5
    $region4: #{fnn_forward.1} parent=1 // pred_region
      _
    $region5: #{fnn_forward.1} parent=1 // pred_fallthru
      _
    // Predicated region
    $region6: #{fnn_forward.1} parent=1 // pred_check
      _
    $region7: #{fnn_forward.1} parent=1 // pred_check_branch
      %16 = sbr.rel (0) target = $region9
    $region8: #{fnn_forward.1} parent=1 // pred_region
      %s18 = ssub.s32 12288, 12288
      %19 = vsyncadd [#allocation3], %s18
      %s20 = sshll.u32 [#allocation2], 4
      %s21 = int_to_ptr.vmem [resolvable:$true] %s20
      %26 = dma.hbm_to_vmem [thread:$0]  %s1, 12288, %s21, [#allocation3], 128, 128, 8
    $region9: #{fnn_forward.1} parent=1 // pred_fallthru
      _
    // Predicated region
    $region10: #{fnn_forward.1} parent=1 // pred_check
      _
    $region11: #{fnn_forward.1} parent=1 // pred_check_branch
      %28 = sbr.rel (0) target = $region13
    $region12: #{fnn_forward.1} parent=1 // pred_region
      _
    $region13: #{fnn_forward.1} parent=1 // pred_fallthru
      _
    // Predicated region
    $region14: #{fnn_forward.1} parent=1 // pred_check
      _
    $region15: #{fnn_forward.1} parent=1 // pred_check_branch
      %30 = sbr.rel (0) target = $region17
    $region16: #{fnn_forward.1} parent=1 // pred_region
      %s32 = ssub.s32 4096, 4096
      %33 = vsyncadd [#allocation6], %s32
      %s34 = sshll.u32 [#allocation5], 4
      %s35 = int_to_ptr.vmem [resolvable:$true] %s34
      %40 = dma.hbm_to_vmem [thread:$0]  %s3, 4096, %s35, [#allocation6], 128, 128, 8
    $region17: #{fnn_forward.1} parent=1 // pred_fallthru
      _
    // Predicated region
    $region18: #{fnn_forward.1} parent=1 // pred_check
      _
    $region19: #{fnn_forward.1} parent=1 // pred_check_branch
      %42 = sbr.rel (0) target = $region21
    $region20: #{fnn_forward.1} parent=1 // pred_region
      _
    $region21: #{fnn_forward.1} parent=1 // pred_fallthru
      _
    // Predicated region
    $region22: #{fnn_forward.1} parent=1 // pred_check
      _
    $region23: #{fnn_forward.1} parent=1 // pred_check_branch
      %44 = sbr.rel (0) target = $region25
    $region24: #{fnn_forward.1} parent=1 // pred_region
      %45 = dma.done [#allocation3], 12288
    $region25: #{fnn_forward.1} parent=1 // pred_fallthru
      _
    // Predicated region
    $region26: #{fnn_forward.1} parent=1 // pred_check
      _
    $region27: #{fnn_forward.1} parent=1 // pred_check_branch
      %47 = sbr.rel (0) target = $region29
    $region28: #{fnn_forward.1} parent=1 // pred_region
      %48 = dma.done [#allocation6], 4096
    $region29: #{fnn_forward.1} parent=1 // pred_fallthru
      _
    %v49 = vld [vmem:[%s0] sm:$0xff]
    %v50 = vld [vmem:[%s0 + $0x8] sm:$0xff]
    %v51 = vld [vmem:[%s0 + $0x10] sm:$0xff]
    %v52 = vld [vmem:[%s0 + $0x18] sm:$0xff]
    %v53 = vld [vmem:[%s0 + $0x20] sm:$0xff]
    %v54 = vld [vmem:[%s0 + $0x28] sm:$0xff]
    %v55 = vld [vmem:[%s0 + $0x30] sm:$0xff]
    %v56 = vld [vmem:[%s0 + $0x38] sm:$0xff]
    %v57 = vld [vmem:[%s0 + $0x40] sm:$0xff]
    %v58 = vld [vmem:[%s0 + $0x48] sm:$0xff]
    %v59 = vld [vmem:[%s0 + $0x50] sm:$0xff]
    %v60 = vld [vmem:[%s0 + $0x58] sm:$0xff]
    %v61 = vld [vmem:[%s0 + $0x60] sm:$0xff]
    %v62 = vld [vmem:[%s0 + $0x68] sm:$0xff]
    %v63 = vld [vmem:[%s0 + $0x70] sm:$0xff]
    %v64 = vld [vmem:[%s0 + $0x78] sm:$0xff]
    %v65 = vlaneseq
    %v66 = vand.u32 %v65, 127
    %v67 = vadd.s32 %v66, 128
    %68 = vset.pattern.permute.xlu0 0
    %69 = vperm.xlu0 %68, %v49
    %v70 = vpop.permute.xlu0 %69
    %71 = vset.pattern.permute.xlu0 0
    %72 = vperm.xlu0 %71, %v50
    %v73 = vpop.permute.xlu0 %72
    %74 = vset.pattern.permute.xlu0 0
    %75 = vperm.xlu0 %74, %v51
    %v76 = vpop.permute.xlu0 %75
    %77 = vset.pattern.permute.xlu0 0
    %78 = vperm.xlu0 %77, %v52
    %v79 = vpop.permute.xlu0 %78
    %80 = vset.pattern.permute.xlu0 0
    %81 = vperm.xlu0 %80, %v53
    %v82 = vpop.permute.xlu0 %81
    %83 = vset.pattern.permute.xlu0 0
    %84 = vperm.xlu0 %83, %v54
    %v85 = vpop.permute.xlu0 %84
    %86 = vset.pattern.permute.xlu0 0
    %87 = vperm.xlu0 %86, %v55
    %v88 = vpop.permute.xlu0 %87
    %89 = vset.pattern.permute.xlu0 0
    %90 = vperm.xlu0 %89, %v56
    %v91 = vpop.permute.xlu0 %90
    %92 = vset.pattern.permute.xlu0 0
    %93 = vperm.xlu0 %92, %v57
    %v94 = vpop.permute.xlu0 %93
    %95 = vset.pattern.permute.xlu0 0
    %96 = vperm.xlu0 %95, %v58
    %v97 = vpop.permute.xlu0 %96
    %98 = vset.pattern.permute.xlu0 0
    %99 = vperm.xlu0 %98, %v59
    %v100 = vpop.permute.xlu0 %99
    %101 = vset.pattern.permute.xlu0 0
    %102 = vperm.xlu0 %101, %v60
    %v103 = vpop.permute.xlu0 %102
    %104 = vset.pattern.permute.xlu0 0
    %105 = vperm.xlu0 %104, %v61
    %v106 = vpop.permute.xlu0 %105
    %107 = vset.pattern.permute.xlu0 0
    %108 = vperm.xlu0 %107, %v62
    %v109 = vpop.permute.xlu0 %108
    %110 = vset.pattern.permute.xlu0 0
    %111 = vperm.xlu0 %110, %v63
    %v112 = vpop.permute.xlu0 %111
    %113 = vset.pattern.permute.xlu0 0
    %114 = vperm.xlu0 %113, %v64
    %v115 = vpop.permute.xlu0 %114
    %vm116 = vcmp.eq.s32.totalorder %v66, %v70
    %vm117 = vcmp.eq.s32.totalorder %v67, %v70
    %vm118 = vcmp.eq.s32.totalorder %v66, %v73
    %vm119 = vcmp.eq.s32.totalorder %v67, %v73
    %vm120 = vcmp.eq.s32.totalorder %v66, %v76
    %vm121 = vcmp.eq.s32.totalorder %v67, %v76
    %vm122 = vcmp.eq.s32.totalorder %v66, %v79
    %vm123 = vcmp.eq.s32.totalorder %v67, %v79
    %vm124 = vcmp.eq.s32.totalorder %v66, %v82
    %vm125 = vcmp.eq.s32.totalorder %v67, %v82
    %vm126 = vcmp.eq.s32.totalorder %v66, %v85
    %vm127 = vcmp.eq.s32.totalorder %v67, %v85
    %vm128 = vcmp.eq.s32.totalorder %v66, %v88
    %vm129 = vcmp.eq.s32.totalorder %v67, %v88
    %vm130 = vcmp.eq.s32.totalorder %v66, %v91
    %vm131 = vcmp.eq.s32.totalorder %v67, %v91
    %vm132 = vcmp.eq.s32.totalorder %v66, %v94
    %vm133 = vcmp.eq.s32.totalorder %v67, %v94
    %vm134 = vcmp.eq.s32.totalorder %v66, %v97
    %vm135 = vcmp.eq.s32.totalorder %v67, %v97
    %vm136 = vcmp.eq.s32.totalorder %v66, %v100
    %vm137 = vcmp.eq.s32.totalorder %v67, %v100
    %vm138 = vcmp.eq.s32.totalorder %v66, %v103
    %vm139 = vcmp.eq.s32.totalorder %v67, %v103
    %vm140 = vcmp.eq.s32.totalorder %v66, %v106
    %vm141 = vcmp.eq.s32.totalorder %v67, %v106
    %vm142 = vcmp.eq.s32.totalorder %v66, %v109
    %vm143 = vcmp.eq.s32.totalorder %v67, %v109
    %vm144 = vcmp.eq.s32.totalorder %v66, %v112
    %vm145 = vcmp.eq.s32.totalorder %v67, %v112
    %vm146 = vcmp.eq.s32.totalorder %v66, %v115
    %vm147 = vcmp.eq.s32.totalorder %v67, %v115
    %v148 = vsel %vm116, 1, 0
    %v149 = vsel %vm117, 1, 0
    %v150 = vsel %vm118, 1, 0
    %v151 = vsel %vm119, 1, 0
    %v152 = vsel %vm120, 1, 0
    %v153 = vsel %vm121, 1, 0
    %v154 = vsel %vm122, 1, 0
    %v155 = vsel %vm123, 1, 0
    %v156 = vsel %vm124, 1, 0
    %v157 = vsel %vm125, 1, 0
    %v158 = vsel %vm126, 1, 0
    %v159 = vsel %vm127, 1, 0
    %v160 = vsel %vm128, 1, 0
    %v161 = vsel %vm129, 1, 0
    %v162 = vsel %vm130, 1, 0
    %v163 = vsel %vm131, 1, 0
    %v164 = vsel %vm132, 1, 0
    %v165 = vsel %vm133, 1, 0
    %v166 = vsel %vm134, 1, 0
    %v167 = vsel %vm135, 1, 0
    %v168 = vsel %vm136, 1, 0
    %v169 = vsel %vm137, 1, 0
    %v170 = vsel %vm138, 1, 0
    %v171 = vsel %vm139, 1, 0
    %v172 = vsel %vm140, 1, 0
    %v173 = vsel %vm141, 1, 0
    %v174 = vsel %vm142, 1, 0
    %v175 = vsel %vm143, 1, 0
    %v176 = vsel %vm144, 1, 0
    %v177 = vsel %vm145, 1, 0
    %v178 = vsel %vm146, 1, 0
    %v179 = vsel %vm147, 1, 0
    %v180 = vcvt.s32.f32 %v148
    %v181 = vcvt.s32.f32 %v149
    %v182 = vcvt.s32.f32 %v150
    %v183 = vcvt.s32.f32 %v151
    %v184 = vcvt.s32.f32 %v152
    %v185 = vcvt.s32.f32 %v153
    %v186 = vcvt.s32.f32 %v154
    %v187 = vcvt.s32.f32 %v155
    %v188 = vcvt.s32.f32 %v156
    %v189 = vcvt.s32.f32 %v157
    %v190 = vcvt.s32.f32 %v158
    %v191 = vcvt.s32.f32 %v159
    %v192 = vcvt.s32.f32 %v160
    %v193 = vcvt.s32.f32 %v161
    %v194 = vcvt.s32.f32 %v162
    %v195 = vcvt.s32.f32 %v163
    %v196 = vcvt.s32.f32 %v164
    %v197 = vcvt.s32.f32 %v165
    %v198 = vcvt.s32.f32 %v166
    %v199 = vcvt.s32.f32 %v167
    %v200 = vcvt.s32.f32 %v168
    %v201 = vcvt.s32.f32 %v169
    %v202 = vcvt.s32.f32 %v170
    %v203 = vcvt.s32.f32 %v171
    %v204 = vcvt.s32.f32 %v172
    %v205 = vcvt.s32.f32 %v173
    %v206 = vcvt.s32.f32 %v174
    %v207 = vcvt.s32.f32 %v175
    %v208 = vcvt.s32.f32 %v176
    %v209 = vcvt.s32.f32 %v177
    %v210 = vcvt.s32.f32 %v178
    %v211 = vcvt.s32.f32 %v179
    %v212 = vpack.c.bf16 %v182, %v180
    %v213 = vpack.c.bf16 %v183, %v181
    %v214 = vpack.c.bf16 %v186, %v184
    %v215 = vpack.c.bf16 %v187, %v185
    %v216 = vpack.c.bf16 %v190, %v188
    %v217 = vpack.c.bf16 %v191, %v189
    %v218 = vpack.c.bf16 %v194, %v192
    %v219 = vpack.c.bf16 %v195, %v193
    %v220 = vpack.c.bf16 %v198, %v196
    %v221 = vpack.c.bf16 %v199, %v197
    %v222 = vpack.c.bf16 %v202, %v200
    %v223 = vpack.c.bf16 %v203, %v201
    %v224 = vpack.c.bf16 %v206, %v204
    %v225 = vpack.c.bf16 %v207, %v205
    %v226 = vpack.c.bf16 %v210, %v208
    %v227 = vpack.c.bf16 %v211, %v209
    %v228 = vld [vmem:[#allocation2] sm:$0xff]
    %v229 = vld [vmem:[#allocation2 + $0x8] sm:$0xff]
    %v230 = vld [vmem:[#allocation2 + $0x10] sm:$0xff]
    %v231 = vld [vmem:[#allocation2 + $0x18] sm:$0xff]
    %v232 = vld [vmem:[#allocation2 + $0x20] sm:$0xff]
    %v233 = vld [vmem:[#allocation2 + $0x28] sm:$0xff]
    %v234 = vld [vmem:[#allocation2 + $0x30] sm:$0xff]
    %v235 = vld [vmem:[#allocation2 + $0x38] sm:$0xff]
    %v236 = vld [vmem:[#allocation2 + $0x40] sm:$0xff]
    %v237 = vld [vmem:[#allocation2 + $0x48] sm:$0xff]
    %v238 = vld [vmem:[#allocation2 + $0x50] sm:$0xff]
    %v239 = vld [vmem:[#allocation2 + $0x58] sm:$0xff]
    %v240 = vld [vmem:[#allocation2 + $0x60] sm:$0xff]
    %v241 = vld [vmem:[#allocation2 + $0x68] sm:$0xff]
    %v242 = vld [vmem:[#allocation2 + $0x70] sm:$0xff]
    %v243 = vld [vmem:[#allocation2 + $0x78] sm:$0xff]
    %v244 = vld [vmem:[#allocation2 + $0x80] sm:$0xff]
    %v245 = vld [vmem:[#allocation2 + $0x88] sm:$0xff]
    %v246 = vld [vmem:[#allocation2 + $0x90] sm:$0xff]
    %v247 = vld [vmem:[#allocation2 + $0x98] sm:$0xff]
    %v248 = vld [vmem:[#allocation2 + $0xa0] sm:$0xff]
    %v249 = vld [vmem:[#allocation2 + $0xa8] sm:$0xff]
    %v250 = vld [vmem:[#allocation2 + $0xb0] sm:$0xff]
    %v251 = vld [vmem:[#allocation2 + $0xb8] sm:$0xff]
    %v252 = vld [vmem:[#allocation2 + $0xc0] sm:$0xff]
    %v253 = vld [vmem:[#allocation2 + $0xc8] sm:$0xff]
    %v254 = vld [vmem:[#allocation2 + $0xd0] sm:$0xff]
    %v255 = vld [vmem:[#allocation2 + $0xd8] sm:$0xff]
    %v256 = vld [vmem:[#allocation2 + $0xe0] sm:$0xff]
    %v257 = vld [vmem:[#allocation2 + $0xe8] sm:$0xff]
    %v258 = vld [vmem:[#allocation2 + $0xf0] sm:$0xff]
    %v259 = vld [vmem:[#allocation2 + $0xf8] sm:$0xff]
    %260 = vset.pattern.permute.xlu0 1
    %261 = vperm.xlu0 %260, %v49
    %v262 = vpop.permute.xlu0 %261
    %263 = vset.pattern.permute.xlu0 1
    %264 = vperm.xlu0 %263, %v50
    %v265 = vpop.permute.xlu0 %264
    %266 = vset.pattern.permute.xlu0 1
    %267 = vperm.xlu0 %266, %v51
    %v268 = vpop.permute.xlu0 %267
    %269 = vset.pattern.permute.xlu0 1
    %270 = vperm.xlu0 %269, %v52
    %v271 = vpop.permute.xlu0 %270
    %272 = vset.pattern.permute.xlu0 1
    %273 = vperm.xlu0 %272, %v53
    %v274 = vpop.permute.xlu0 %273
    %275 = vset.pattern.permute.xlu0 1
    %276 = vperm.xlu0 %275, %v54
    %v277 = vpop.permute.xlu0 %276
    %278 = vset.pattern.permute.xlu0 1
    %279 = vperm.xlu0 %278, %v55
    %v280 = vpop.permute.xlu0 %279
    %281 = vset.pattern.permute.xlu0 1
    %282 = vperm.xlu0 %281, %v56
    %v283 = vpop.permute.xlu0 %282
    %284 = vset.pattern.permute.xlu0 1
    %285 = vperm.xlu0 %284, %v57
    %v286 = vpop.permute.xlu0 %285
    %287 = vset.pattern.permute.xlu0 1
    %288 = vperm.xlu0 %287, %v58
    %v289 = vpop.permute.xlu0 %288
    %290 = vset.pattern.permute.xlu0 1
    %291 = vperm.xlu0 %290, %v59
    %v292 = vpop.permute.xlu0 %291
    %293 = vset.pattern.permute.xlu0 1
    %294 = vperm.xlu0 %293, %v60
    %v295 = vpop.permute.xlu0 %294
    %296 = vset.pattern.permute.xlu0 1
    %297 = vperm.xlu0 %296, %v61
    %v298 = vpop.permute.xlu0 %297
    %299 = vset.pattern.permute.xlu0 1
    %300 = vperm.xlu0 %299, %v62
    %v301 = vpop.permute.xlu0 %300
    %302 = vset.pattern.permute.xlu0 1
    %303 = vperm.xlu0 %302, %v63
    %v304 = vpop.permute.xlu0 %303
    %305 = vset.pattern.permute.xlu0 1
    %306 = vperm.xlu0 %305, %v64
    %v307 = vpop.permute.xlu0 %306
    %vm308 = vcmp.eq.s32.totalorder %v66, %v262
    %vm309 = vcmp.eq.s32.totalorder %v67, %v262
    %vm310 = vcmp.eq.s32.totalorder %v66, %v265
    %vm311 = vcmp.eq.s32.totalorder %v67, %v265
    %vm312 = vcmp.eq.s32.totalorder %v66, %v268
    %vm313 = vcmp.eq.s32.totalorder %v67, %v268
    %vm314 = vcmp.eq.s32.totalorder %v66, %v271
    %vm315 = vcmp.eq.s32.totalorder %v67, %v271
    %vm316 = vcmp.eq.s32.totalorder %v66, %v274
    %vm317 = vcmp.eq.s32.totalorder %v67, %v274
    %vm318 = vcmp.eq.s32.totalorder %v66, %v277
    %vm319 = vcmp.eq.s32.totalorder %v67, %v277
    %vm320 = vcmp.eq.s32.totalorder %v66, %v280
    %vm321 = vcmp.eq.s32.totalorder %v67, %v280
    %vm322 = vcmp.eq.s32.totalorder %v66, %v283
    %vm323 = vcmp.eq.s32.totalorder %v67, %v283
    %vm324 = vcmp.eq.s32.totalorder %v66, %v286
    %vm325 = vcmp.eq.s32.totalorder %v67, %v286
    %vm326 = vcmp.eq.s32.totalorder %v66, %v289
    %vm327 = vcmp.eq.s32.totalorder %v67, %v289
    %vm328 = vcmp.eq.s32.totalorder %v66, %v292
    %vm329 = vcmp.eq.s32.totalorder %v67, %v292
    %vm330 = vcmp.eq.s32.totalorder %v66, %v295
    %vm331 = vcmp.eq.s32.totalorder %v67, %v295
    %vm332 = vcmp.eq.s32.totalorder %v66, %v298
    %vm333 = vcmp.eq.s32.totalorder %v67, %v298
    %vm334 = vcmp.eq.s32.totalorder %v66, %v301
    %vm335 = vcmp.eq.s32.totalorder %v67, %v301
    %vm336 = vcmp.eq.s32.totalorder %v66, %v304
    %vm337 = vcmp.eq.s32.totalorder %v67, %v304
    %vm338 = vcmp.eq.s32.totalorder %v66, %v307
    %vm339 = vcmp.eq.s32.totalorder %v67, %v307
    %v340 = vsel %vm308, 1, 0
    %v341 = vsel %vm309, 1, 0
    %v342 = vsel %vm310, 1, 0
    %v343 = vsel %vm311, 1, 0
    %v344 = vsel %vm312, 1, 0
    %v345 = vsel %vm313, 1, 0
    %v346 = vsel %vm314, 1, 0
    %v347 = vsel %vm315, 1, 0
    %v348 = vsel %vm316, 1, 0
    %v349 = vsel %vm317, 1, 0
    %v350 = vsel %vm318, 1, 0
    %v351 = vsel %vm319, 1, 0
    %v352 = vsel %vm320, 1, 0
    %v353 = vsel %vm321, 1, 0
    %v354 = vsel %vm322, 1, 0
    %v355 = vsel %vm323, 1, 0
    %v356 = vsel %vm324, 1, 0
    %v357 = vsel %vm325, 1, 0
    %v358 = vsel %vm326, 1, 0
    %v359 = vsel %vm327, 1, 0
    %v360 = vsel %vm328, 1, 0
    %v361 = vsel %vm329, 1, 0
    %v362 = vsel %vm330, 1, 0
    %v363 = vsel %vm331, 1, 0
    %v364 = vsel %vm332, 1, 0
    %v365 = vsel %vm333, 1, 0
    %v366 = vsel %vm334, 1, 0
    %v367 = vsel %vm335, 1, 0
    %v368 = vsel %vm336, 1, 0
    %v369 = vsel %vm337, 1, 0
    %v370 = vsel %vm338, 1, 0
    %v371 = vsel %vm339, 1, 0
    %v372 = vcvt.s32.f32 %v340
    %v373 = vcvt.s32.f32 %v341
    %v374 = vcvt.s32.f32 %v342
    %v375 = vcvt.s32.f32 %v343
    %v376 = vcvt.s32.f32 %v344
    %v377 = vcvt.s32.f32 %v345
    %v378 = vcvt.s32.f32 %v346
    %v379 = vcvt.s32.f32 %v347
    %v380 = vcvt.s32.f32 %v348
    %v381 = vcvt.s32.f32 %v349
    %v382 = vcvt.s32.f32 %v350
    %v383 = vcvt.s32.f32 %v351
    %v384 = vcvt.s32.f32 %v352
    %v385 = vcvt.s32.f32 %v353
    %v386 = vcvt.s32.f32 %v354
    %v387 = vcvt.s32.f32 %v355
    %v388 = vcvt.s32.f32 %v356
    %v389 = vcvt.s32.f32 %v357
    %v390 = vcvt.s32.f32 %v358
    %v391 = vcvt.s32.f32 %v359
    %v392 = vcvt.s32.f32 %v360
    %v393 = vcvt.s32.f32 %v361
    %v394 = vcvt.s32.f32 %v362
    %v395 = vcvt.s32.f32 %v363
    %v396 = vcvt.s32.f32 %v364
    %v397 = vcvt.s32.f32 %v365
    %v398 = vcvt.s32.f32 %v366
    %v399 = vcvt.s32.f32 %v367
    %v400 = vcvt.s32.f32 %v368
    %v401 = vcvt.s32.f32 %v369
    %v402 = vcvt.s32.f32 %v370
    %v403 = vcvt.s32.f32 %v371
    %v404 = vpack.c.bf16 %v374, %v372
    %v405 = vpack.c.bf16 %v375, %v373
    %v406 = vpack.c.bf16 %v378, %v376
    %v407 = vpack.c.bf16 %v379, %v377
    %v408 = vpack.c.bf16 %v382, %v380
    %v409 = vpack.c.bf16 %v383, %v381
    %v410 = vpack.c.bf16 %v386, %v384
    %v411 = vpack.c.bf16 %v387, %v385
    %v412 = vpack.c.bf16 %v390, %v388
    %v413 = vpack.c.bf16 %v391, %v389
    %v414 = vpack.c.bf16 %v394, %v392
    %v415 = vpack.c.bf16 %v395, %v393
    %v416 = vpack.c.bf16 %v398, %v396
    %v417 = vpack.c.bf16 %v399, %v397
    %v418 = vpack.c.bf16 %v402, %v400
    %v419 = vpack.c.bf16 %v403, %v401
    %v420 = vld [vmem:[#allocation2 + $0x100] sm:$0xff]
    %v421 = vld [vmem:[#allocation2 + $0x108] sm:$0xff]
    %v422 = vld [vmem:[#allocation2 + $0x110] sm:$0xff]
    %v423 = vld [vmem:[#allocation2 + $0x118] sm:$0xff]
    %v424 = vld [vmem:[#allocation2 + $0x120] sm:$0xff]
    %v425 = vld [vmem:[#allocation2 + $0x128] sm:$0xff]
    %v426 = vld [vmem:[#allocation2 + $0x130] sm:$0xff]
    %v427 = vld [vmem:[#allocation2 + $0x138] sm:$0xff]
    %v428 = vld [vmem:[#allocation2 + $0x140] sm:$0xff]
    %v429 = vld [vmem:[#allocation2 + $0x148] sm:$0xff]
    %v430 = vld [vmem:[#allocation2 + $0x150] sm:$0xff]
    %v431 = vld [vmem:[#allocation2 + $0x158] sm:$0xff]
    %v432 = vld [vmem:[#allocation2 + $0x160] sm:$0xff]
    %v433 = vld [vmem:[#allocation2 + $0x168] sm:$0xff]
    %v434 = vld [vmem:[#allocation2 + $0x170] sm:$0xff]
    %v435 = vld [vmem:[#allocation2 + $0x178] sm:$0xff]
    %v436 = vld [vmem:[#allocation2 + $0x180] sm:$0xff]
    %v437 = vld [vmem:[#allocation2 + $0x188] sm:$0xff]
    %v438 = vld [vmem:[#allocation2 + $0x190] sm:$0xff]
    %v439 = vld [vmem:[#allocation2 + $0x198] sm:$0xff]
    %v440 = vld [vmem:[#allocation2 + $0x1a0] sm:$0xff]
    %v441 = vld [vmem:[#allocation2 + $0x1a8] sm:$0xff]
    %v442 = vld [vmem:[#allocation2 + $0x1b0] sm:$0xff]
    %v443 = vld [vmem:[#allocation2 + $0x1b8] sm:$0xff]
    %v444 = vld [vmem:[#allocation2 + $0x1c0] sm:$0xff]
    %v445 = vld [vmem:[#allocation2 + $0x1c8] sm:$0xff]
    %v446 = vld [vmem:[#allocation2 + $0x1d0] sm:$0xff]
    %v447 = vld [vmem:[#allocation2 + $0x1d8] sm:$0xff]
    %v448 = vld [vmem:[#allocation2 + $0x1e0] sm:$0xff]
    %v449 = vld [vmem:[#allocation2 + $0x1e8] sm:$0xff]
    %v450 = vld [vmem:[#allocation2 + $0x1f0] sm:$0xff]
    %v451 = vld [vmem:[#allocation2 + $0x1f8] sm:$0xff]
    %v484 = vunpack.c.l.b16 %v420
    %v485 = vunpack.c.h.b16 %v420
    %v486 = vunpack.c.l.b16 %v421
    %v487 = vunpack.c.h.b16 %v421
    %v488 = vunpack.c.l.b16 %v422
    %v489 = vunpack.c.h.b16 %v422
    %v490 = vunpack.c.l.b16 %v423
    %v491 = vunpack.c.h.b16 %v423
    %v492 = vunpack.c.l.b16 %v424
    %v493 = vunpack.c.h.b16 %v424
    %v494 = vunpack.c.l.b16 %v425
    %v495 = vunpack.c.h.b16 %v425
    %v496 = vunpack.c.l.b16 %v426
    %v497 = vunpack.c.h.b16 %v426
    %v498 = vunpack.c.l.b16 %v427
    %v499 = vunpack.c.h.b16 %v427
    %v500 = vunpack.c.l.b16 %v428
    %v501 = vunpack.c.h.b16 %v428
    %v502 = vunpack.c.l.b16 %v429
    %v503 = vunpack.c.h.b16 %v429
    %v504 = vunpack.c.l.b16 %v430
    %v505 = vunpack.c.h.b16 %v430
    %v506 = vunpack.c.l.b16 %v431
    %v507 = vunpack.c.h.b16 %v431
    %v508 = vunpack.c.l.b16 %v432
    %v509 = vunpack.c.h.b16 %v432
    %v510 = vunpack.c.l.b16 %v433
    %v511 = vunpack.c.h.b16 %v433
    %v512 = vunpack.c.l.b16 %v434
    %v513 = vunpack.c.h.b16 %v434
    %v514 = vunpack.c.l.b16 %v435
    %v515 = vunpack.c.h.b16 %v435
    %v516 = vunpack.c.l.b16 %v436
    %v517 = vunpack.c.h.b16 %v436
    %v518 = vunpack.c.l.b16 %v437
    %v519 = vunpack.c.h.b16 %v437
    %v520 = vunpack.c.l.b16 %v438
    %v521 = vunpack.c.h.b16 %v438
    %v522 = vunpack.c.l.b16 %v439
    %v523 = vunpack.c.h.b16 %v439
    %v524 = vunpack.c.l.b16 %v440
    %v525 = vunpack.c.h.b16 %v440
    %v526 = vunpack.c.l.b16 %v441
    %v527 = vunpack.c.h.b16 %v441
    %v528 = vunpack.c.l.b16 %v442
    %v529 = vunpack.c.h.b16 %v442
    %v530 = vunpack.c.l.b16 %v443
    %v531 = vunpack.c.h.b16 %v443
    %v532 = vunpack.c.l.b16 %v444
    %v533 = vunpack.c.h.b16 %v444
    %v534 = vunpack.c.l.b16 %v445
    %v535 = vunpack.c.h.b16 %v445
    %v536 = vunpack.c.l.b16 %v446
    %v537 = vunpack.c.h.b16 %v446
    %v538 = vunpack.c.l.b16 %v447
    %v539 = vunpack.c.h.b16 %v447
    %v540 = vunpack.c.l.b16 %v448
    %v541 = vunpack.c.h.b16 %v448
    %v542 = vunpack.c.l.b16 %v449
    %v543 = vunpack.c.h.b16 %v449
    %v544 = vunpack.c.l.b16 %v450
    %v545 = vunpack.c.h.b16 %v450
    %v546 = vunpack.c.l.b16 %v451
    %v547 = vunpack.c.h.b16 %v451
    %v548 = vpack.c.b16 %v486, %v484
    %v549 = vpack.c.b16 %v487, %v485
    %v550 = vpack.c.b16 %v490, %v488
    %v551 = vpack.c.b16 %v491, %v489
    %v552 = vpack.c.b16 %v494, %v492
    %v553 = vpack.c.b16 %v495, %v493
    %v554 = vpack.c.b16 %v498, %v496
    %v555 = vpack.c.b16 %v499, %v497
    %v556 = vpack.c.b16 %v502, %v500
    %v557 = vpack.c.b16 %v503, %v501
    %v558 = vpack.c.b16 %v506, %v504
    %v559 = vpack.c.b16 %v507, %v505
    %v560 = vpack.c.b16 %v510, %v508
    %v561 = vpack.c.b16 %v511, %v509
    %v562 = vpack.c.b16 %v514, %v512
    %v563 = vpack.c.b16 %v515, %v513
    %v564 = vpack.c.b16 %v518, %v516
    %v565 = vpack.c.b16 %v519, %v517
    %v566 = vpack.c.b16 %v522, %v520
    %v567 = vpack.c.b16 %v523, %v521
    %v568 = vpack.c.b16 %v526, %v524
    %v569 = vpack.c.b16 %v527, %v525
    %v570 = vpack.c.b16 %v530, %v528
    %v571 = vpack.c.b16 %v531, %v529
    %v572 = vpack.c.b16 %v534, %v532
    %v573 = vpack.c.b16 %v535, %v533
    %v574 = vpack.c.b16 %v538, %v536
    %v575 = vpack.c.b16 %v539, %v537
    %v576 = vpack.c.b16 %v542, %v540
    %v577 = vpack.c.b16 %v543, %v541
    %v578 = vpack.c.b16 %v546, %v544
    %v579 = vpack.c.b16 %v547, %v545
    %612 = vmatprep.subr.bf16.mxu0 %v549
    %613 = vmatpush1.bf16.msra.mxu0 %v548
    %614 = vmatprep.subr.bf16.mxu0 %v551
    %615 = vmatpush1.bf16.msra.mxu0 %v550
    %616 = vmatprep.subr.bf16.mxu0 %v553
    %617 = vmatpush1.bf16.msra.mxu0 %v552
    %618 = vmatprep.subr.bf16.mxu0 %v555
    %619 = vmatpush1.bf16.msra.mxu0 %v554
    %620 = vmatprep.subr.bf16.mxu0 %v557
    %621 = vmatpush1.bf16.msra.mxu0 %v556
    %622 = vmatprep.subr.bf16.mxu0 %v559
    %623 = vmatpush1.bf16.msra.mxu0 %v558
    %624 = vmatprep.subr.bf16.mxu0 %v561
    %625 = vmatpush1.bf16.msra.mxu0 %v560
    %626 = vmatprep.subr.bf16.mxu0 %v563
    %627 = vmatpush1.bf16.msra.mxu0 %v562
    %628 = vmatprep.subr.bf16.mxu0 %v565
    %629 = vmatpush1.bf16.msra.mxu0 %v564
    %630 = vmatprep.subr.bf16.mxu0 %v567
    %631 = vmatpush1.bf16.msra.mxu0 %v566
    %632 = vmatprep.subr.bf16.mxu0 %v569
    %633 = vmatpush1.bf16.msra.mxu0 %v568
    %634 = vmatprep.subr.bf16.mxu0 %v571
    %635 = vmatpush1.bf16.msra.mxu0 %v570
    %636 = vmatprep.subr.bf16.mxu0 %v573
    %637 = vmatpush1.bf16.msra.mxu0 %v572
    %638 = vmatprep.subr.bf16.mxu0 %v575
    %639 = vmatpush1.bf16.msra.mxu0 %v574
    %640 = vmatprep.subr.bf16.mxu0 %v577
    %641 = vmatpush1.bf16.msra.mxu0 %v576
    %642 = vmatprep.subr.bf16.mxu0 %v579
    %643 = vmatpush1.bf16.msra.mxu0 %v578
    %644 = vmatprep.mubr.bf16.mxu0 %v405
    %645 = vmatmul.mubr.bf16.gmra.mrb[0].mxu0 %v404
    %v646 = vpop.f32.mrb[0].mxu0
    %v647 = vadd.f32 0.0, %v646
    %v648 = vpop.f32.mrb[0].mxu0
    %v649 = vadd.f32 0.0, %v648
    %v650 = vpop.f32.mrb[0].mxu0
    %v651 = vadd.f32 0.0, %v650
    %v652 = vpop.f32.mrb[0].mxu0
    %v653 = vadd.f32 0.0, %v652
    %654 = vmatprep.mubr.bf16.mxu0 %v407
    %655 = vmatmul.mubr.bf16.gmra.mrb[0].mxu0 %v406
    %v656 = vpop.f32.mrb[0].mxu0
    %v657 = vadd.f32 0.0, %v656
    %v658 = vpop.f32.mrb[0].mxu0
    %v659 = vadd.f32 0.0, %v658
    %v660 = vpop.f32.mrb[0].mxu0
    %v661 = vadd.f32 0.0, %v660
    %v662 = vpop.f32.mrb[0].mxu0
    %v663 = vadd.f32 0.0, %v662
    %664 = vmatprep.mubr.bf16.mxu0 %v409
    %665 = vmatmul.mubr.bf16.gmra.mrb[0].mxu0 %v408
    %v666 = vpop.f32.mrb[0].mxu0
    %v667 = vadd.f32 0.0, %v666
    %v668 = vpop.f32.mrb[0].mxu0
    %v669 = vadd.f32 0.0, %v668
    %v670 = vpop.f32.mrb[0].mxu0
    %v671 = vadd.f32 0.0, %v670
    %v672 = vpop.f32.mrb[0].mxu0
    %v673 = vadd.f32 0.0, %v672
    %674 = vmatprep.mubr.bf16.mxu0 %v411
    %675 = vmatmul.mubr.bf16.gmra.mrb[0].mxu0 %v410
    %v676 = vpop.f32.mrb[0].mxu0
    %v677 = vadd.f32 0.0, %v676
    %v678 = vpop.f32.mrb[0].mxu0
    %v679 = vadd.f32 0.0, %v678
    %v680 = vpop.f32.mrb[0].mxu0
    %v681 = vadd.f32 0.0, %v680
    %v682 = vpop.f32.mrb[0].mxu0
    %v683 = vadd.f32 0.0, %v682
    %684 = vmatprep.mubr.bf16.mxu0 %v413
    %685 = vmatmul.mubr.bf16.gmra.mrb[0].mxu0 %v412
    %v686 = vpop.f32.mrb[0].mxu0
    %v687 = vadd.f32 0.0, %v686
    %v688 = vpop.f32.mrb[0].mxu0
    %v689 = vadd.f32 0.0, %v688
    %v690 = vpop.f32.mrb[0].mxu0
    %v691 = vadd.f32 0.0, %v690
    %v692 = vpop.f32.mrb[0].mxu0
    %v693 = vadd.f32 0.0, %v692
    %694 = vmatprep.mubr.bf16.mxu0 %v415
    %695 = vmatmul.mubr.bf16.gmra.mrb[0].mxu0 %v414
    %v696 = vpop.f32.mrb[0].mxu0
    %v697 = vadd.f32 0.0, %v696
    %v698 = vpop.f32.mrb[0].mxu0
    %v699 = vadd.f32 0.0, %v698
    %v700 = vpop.f32.mrb[0].mxu0
    %v701 = vadd.f32 0.0, %v700
    %v702 = vpop.f32.mrb[0].mxu0
    %v703 = vadd.f32 0.0, %v702
    %704 = vmatprep.mubr.bf16.mxu0 %v417
    %705 = vmatmul.mubr.bf16.gmra.mrb[0].mxu0 %v416
    %v706 = vpop.f32.mrb[0].mxu0
    %v707 = vadd.f32 0.0, %v706
    %v708 = vpop.f32.mrb[0].mxu0
    %v709 = vadd.f32 0.0, %v708
    %v710 = vpop.f32.mrb[0].mxu0
    %v711 = vadd.f32 0.0, %v710
    %v712 = vpop.f32.mrb[0].mxu0
    %v713 = vadd.f32 0.0, %v712
    %714 = vmatprep.mubr.bf16.mxu0 %v419
    %715 = vmatmul.mubr.bf16.gmra.mrb[0].mxu0 %v418
    %v716 = vpop.f32.mrb[0].mxu0
    %v717 = vadd.f32 0.0, %v716
    %v718 = vpop.f32.mrb[0].mxu0
    %v719 = vadd.f32 0.0, %v718
    %v720 = vpop.f32.mrb[0].mxu0
    %v721 = vadd.f32 0.0, %v720
    %v722 = vpop.f32.mrb[0].mxu0
    %v723 = vadd.f32 0.0, %v722
    %724 = vdwg.mxu0
    %v757 = vunpack.c.l.b16 %v228
    %v758 = vunpack.c.h.b16 %v228
    %v759 = vunpack.c.l.b16 %v229
    %v760 = vunpack.c.h.b16 %v229
    %v761 = vunpack.c.l.b16 %v230
    %v762 = vunpack.c.h.b16 %v230
    %v763 = vunpack.c.l.b16 %v231
    %v764 = vunpack.c.h.b16 %v231
    %v765 = vunpack.c.l.b16 %v232
    %v766 = vunpack.c.h.b16 %v232
    %v767 = vunpack.c.l.b16 %v233
    %v768 = vunpack.c.h.b16 %v233
    %v769 = vunpack.c.l.b16 %v234
    %v770 = vunpack.c.h.b16 %v234
    %v771 = vunpack.c.l.b16 %v235
    %v772 = vunpack.c.h.b16 %v235
    %v773 = vunpack.c.l.b16 %v236
    %v774 = vunpack.c.h.b16 %v236
    %v775 = vunpack.c.l.b16 %v237
    %v776 = vunpack.c.h.b16 %v237
    %v777 = vunpack.c.l.b16 %v238
    %v778 = vunpack.c.h.b16 %v238
    %v779 = vunpack.c.l.b16 %v239
    %v780 = vunpack.c.h.b16 %v239
    %v781 = vunpack.c.l.b16 %v240
    %v782 = vunpack.c.h.b16 %v240
    %v783 = vunpack.c.l.b16 %v241
    %v784 = vunpack.c.h.b16 %v241
    %v785 = vunpack.c.l.b16 %v242
    %v786 = vunpack.c.h.b16 %v242
    %v787 = vunpack.c.l.b16 %v243
    %v788 = vunpack.c.h.b16 %v243
    %v789 = vunpack.c.l.b16 %v244
    %v790 = vunpack.c.h.b16 %v244
    %v791 = vunpack.c.l.b16 %v245
    %v792 = vunpack.c.h.b16 %v245
    %v793 = vunpack.c.l.b16 %v246
    %v794 = vunpack.c.h.b16 %v246
    %v795 = vunpack.c.l.b16 %v247
    %v796 = vunpack.c.h.b16 %v247
    %v797 = vunpack.c.l.b16 %v248
    %v798 = vunpack.c.h.b16 %v248
    %v799 = vunpack.c.l.b16 %v249
    %v800 = vunpack.c.h.b16 %v249
    %v801 = vunpack.c.l.b16 %v250
    %v802 = vunpack.c.h.b16 %v250
    %v803 = vunpack.c.l.b16 %v251
    %v804 = vunpack.c.h.b16 %v251
    %v805 = vunpack.c.l.b16 %v252
    %v806 = vunpack.c.h.b16 %v252
    %v807 = vunpack.c.l.b16 %v253
    %v808 = vunpack.c.h.b16 %v253
    %v809 = vunpack.c.l.b16 %v254
    %v810 = vunpack.c.h.b16 %v254
    %v811 = vunpack.c.l.b16 %v255
    %v812 = vunpack.c.h.b16 %v255
    %v813 = vunpack.c.l.b16 %v256
    %v814 = vunpack.c.h.b16 %v256
    %v815 = vunpack.c.l.b16 %v257
    %v816 = vunpack.c.h.b16 %v257
    %v817 = vunpack.c.l.b16 %v258
    %v818 = vunpack.c.h.b16 %v258
    %v819 = vunpack.c.l.b16 %v259
    %v820 = vunpack.c.h.b16 %v259
    %v821 = vpack.c.b16 %v759, %v757
    %v822 = vpack.c.b16 %v760, %v758
    %v823 = vpack.c.b16 %v763, %v761
    %v824 = vpack.c.b16 %v764, %v762
    %v825 = vpack.c.b16 %v767, %v765
    %v826 = vpack.c.b16 %v768, %v766
    %v827 = vpack.c.b16 %v771, %v769
    %v828 = vpack.c.b16 %v772, %v770
    %v829 = vpack.c.b16 %v775, %v773
    %v830 = vpack.c.b16 %v776, %v774
    %v831 = vpack.c.b16 %v779, %v777
    %v832 = vpack.c.b16 %v780, %v778
    %v833 = vpack.c.b16 %v783, %v781
    %v834 = vpack.c.b16 %v784, %v782
    %v835 = vpack.c.b16 %v787, %v785
    %v836 = vpack.c.b16 %v788, %v786
    %v837 = vpack.c.b16 %v791, %v789
    %v838 = vpack.c.b16 %v792, %v790
    %v839 = vpack.c.b16 %v795, %v793
    %v840 = vpack.c.b16 %v796, %v794
    %v841 = vpack.c.b16 %v799, %v797
    %v842 = vpack.c.b16 %v800, %v798
    %v843 = vpack.c.b16 %v803, %v801
    %v844 = vpack.c.b16 %v804, %v802
    %v845 = vpack.c.b16 %v807, %v805
    %v846 = vpack.c.b16 %v808, %v806
    %v847 = vpack.c.b16 %v811, %v809
    %v848 = vpack.c.b16 %v812, %v810
    %v849 = vpack.c.b16 %v815, %v813
    %v850 = vpack.c.b16 %v816, %v814
    %v851 = vpack.c.b16 %v819, %v817
    %v852 = vpack.c.b16 %v820, %v818
    %885 = vmatprep.subr.bf16.mxu0 %v822
    %886 = vmatpush1.bf16.msra.mxu0 %v821
    %887 = vmatprep.subr.bf16.mxu0 %v824
    %888 = vmatpush1.bf16.msra.mxu0 %v823
    %889 = vmatprep.subr.bf16.mxu0 %v826
    %890 = vmatpush1.bf16.msra.mxu0 %v825
    %891 = vmatprep.subr.bf16.mxu0 %v828
    %892 = vmatpush1.bf16.msra.mxu0 %v827
    %893 = vmatprep.subr.bf16.mxu0 %v830
    %894 = vmatpush1.bf16.msra.mxu0 %v829
    %895 = vmatprep.subr.bf16.mxu0 %v832
    %896 = vmatpush1.bf16.msra.mxu0 %v831
    %897 = vmatprep.subr.bf16.mxu0 %v834
    %898 = vmatpush1.bf16.msra.mxu0 %v833
    %899 = vmatprep.subr.bf16.mxu0 %v836
    %900 = vmatpush1.bf16.msra.mxu0 %v835
    %901 = vmatprep.subr.bf16.mxu0 %v838
    %902 = vmatpush1.bf16.msra.mxu0 %v837
    %903 = vmatprep.subr.bf16.mxu0 %v840
    %904 = vmatpush1.bf16.msra.mxu0 %v839
    %905 = vmatprep.subr.bf16.mxu0 %v842
    %906 = vmatpush1.bf16.msra.mxu0 %v841
    %907 = vmatprep.subr.bf16.mxu0 %v844
    %908 = vmatpush1.bf16.msra.mxu0 %v843
    %909 = vmatprep.subr.bf16.mxu0 %v846
    %910 = vmatpush1.bf16.msra.mxu0 %v845
    %911 = vmatprep.subr.bf16.mxu0 %v848
    %912 = vmatpush1.bf16.msra.mxu0 %v847
    %913 = vmatprep.subr.bf16.mxu0 %v850
    %914 = vmatpush1.bf16.msra.mxu0 %v849
    %915 = vmatprep.subr.bf16.mxu0 %v852
    %916 = vmatpush1.bf16.msra.mxu0 %v851
    %917 = vmatprep.mubr.bf16.mxu0 %v213
    %918 = vmatmul.mubr.bf16.gmra.mrb[0].mxu0 %v212
    %v919 = vpop.f32.mrb[0].mxu0
    %v920 = vadd.f32 %v647, %v919
    %v921 = vpop.f32.mrb[0].mxu0
    %v922 = vadd.f32 %v649, %v921
    %v923 = vpop.f32.mrb[0].mxu0
    %v924 = vadd.f32 %v651, %v923
    %v925 = vpop.f32.mrb[0].mxu0
    %v926 = vadd.f32 %v653, %v925
    %927 = vmatprep.mubr.bf16.mxu0 %v215
    %928 = vmatmul.mubr.bf16.gmra.mrb[0].mxu0 %v214
    %v929 = vpop.f32.mrb[0].mxu0
    %v930 = vadd.f32 %v657, %v929
    %v931 = vpop.f32.mrb[0].mxu0
    %v932 = vadd.f32 %v659, %v931
    %v933 = vpop.f32.mrb[0].mxu0
    %v934 = vadd.f32 %v661, %v933
    %v935 = vpop.f32.mrb[0].mxu0
    %v936 = vadd.f32 %v663, %v935
    %937 = vmatprep.mubr.bf16.mxu0 %v217
    %938 = vmatmul.mubr.bf16.gmra.mrb[0].mxu0 %v216
    %v939 = vpop.f32.mrb[0].mxu0
    %v940 = vadd.f32 %v667, %v939
    %v941 = vpop.f32.mrb[0].mxu0
    %v942 = vadd.f32 %v669, %v941
    %v943 = vpop.f32.mrb[0].mxu0
    %v944 = vadd.f32 %v671, %v943
    %v945 = vpop.f32.mrb[0].mxu0
    %v946 = vadd.f32 %v673, %v945
    %947 = vmatprep.mubr.bf16.mxu0 %v219
    %948 = vmatmul.mubr.bf16.gmra.mrb[0].mxu0 %v218
    %v949 = vpop.f32.mrb[0].mxu0
    %v950 = vadd.f32 %v677, %v949
    %v951 = vpop.f32.mrb[0].mxu0
    %v952 = vadd.f32 %v679, %v951
    %v953 = vpop.f32.mrb[0].mxu0
    %v954 = vadd.f32 %v681, %v953
    %v955 = vpop.f32.mrb[0].mxu0
    %v956 = vadd.f32 %v683, %v955
    %957 = vmatprep.mubr.bf16.mxu0 %v221
    %958 = vmatmul.mubr.bf16.gmra.mrb[0].mxu0 %v220
    %v959 = vpop.f32.mrb[0].mxu0
    %v960 = vadd.f32 %v687, %v959
    %v961 = vpop.f32.mrb[0].mxu0
    %v962 = vadd.f32 %v689, %v961
    %v963 = vpop.f32.mrb[0].mxu0
    %v964 = vadd.f32 %v691, %v963
    %v965 = vpop.f32.mrb[0].mxu0
    %v966 = vadd.f32 %v693, %v965
    %967 = vmatprep.mubr.bf16.mxu0 %v223
    %968 = vmatmul.mubr.bf16.gmra.mrb[0].mxu0 %v222
    %v969 = vpop.f32.mrb[0].mxu0
    %v970 = vadd.f32 %v697, %v969
    %v971 = vpop.f32.mrb[0].mxu0
    %v972 = vadd.f32 %v699, %v971
    %v973 = vpop.f32.mrb[0].mxu0
    %v974 = vadd.f32 %v701, %v973
    %v975 = vpop.f32.mrb[0].mxu0
    %v976 = vadd.f32 %v703, %v975
    %977 = vmatprep.mubr.bf16.mxu0 %v225
    %978 = vmatmul.mubr.bf16.gmra.mrb[0].mxu0 %v224
    %v979 = vpop.f32.mrb[0].mxu0
    %v980 = vadd.f32 %v707, %v979
    %v981 = vpop.f32.mrb[0].mxu0
    %v982 = vadd.f32 %v709, %v981
    %v983 = vpop.f32.mrb[0].mxu0
    %v984 = vadd.f32 %v711, %v983
    %v985 = vpop.f32.mrb[0].mxu0
    %v986 = vadd.f32 %v713, %v985
    %987 = vmatprep.mubr.bf16.mxu0 %v227
    %988 = vmatmul.mubr.bf16.gmra.mrb[0].mxu0 %v226
    %v989 = vpop.f32.mrb[0].mxu0
    %v990 = vadd.f32 %v717, %v989
    %v991 = vpop.f32.mrb[0].mxu0
    %v992 = vadd.f32 %v719, %v991
    %v993 = vpop.f32.mrb[0].mxu0
    %v994 = vadd.f32 %v721, %v993
    %v995 = vpop.f32.mrb[0].mxu0
    %v996 = vadd.f32 %v723, %v995
    %997 = vdwg.mxu0
    %998 = vset.pattern.permute.xlu0 2
    %999 = vperm.xlu0 %998, %v49
    %v1000 = vpop.permute.xlu0 %999
    %1001 = vset.pattern.permute.xlu0 2
    %1002 = vperm.xlu0 %1001, %v50
    %v1003 = vpop.permute.xlu0 %1002
    %1004 = vset.pattern.permute.xlu0 2
    %1005 = vperm.xlu0 %1004, %v51
    %v1006 = vpop.permute.xlu0 %1005
    %1007 = vset.pattern.permute.xlu0 2
    %1008 = vperm.xlu0 %1007, %v52
    %v1009 = vpop.permute.xlu0 %1008
    %1010 = vset.pattern.permute.xlu0 2
    %1011 = vperm.xlu0 %1010, %v53
    %v1012 = vpop.permute.xlu0 %1011
    %1013 = vset.pattern.permute.xlu0 2
    %1014 = vperm.xlu0 %1013, %v54
    %v1015 = vpop.permute.xlu0 %1014
    %1016 = vset.pattern.permute.xlu0 2
    %1017 = vperm.xlu0 %1016, %v55
    %v1018 = vpop.permute.xlu0 %1017
    %1019 = vset.pattern.permute.xlu0 2
    %1020 = vperm.xlu0 %1019, %v56
    %v1021 = vpop.permute.xlu0 %1020
    %1022 = vset.pattern.permute.xlu0 2
    %1023 = vperm.xlu0 %1022, %v57
    %v1024 = vpop.permute.xlu0 %1023
    %1025 = vset.pattern.permute.xlu0 2
    %1026 = vperm.xlu0 %1025, %v58
    %v1027 = vpop.permute.xlu0 %1026
    %1028 = vset.pattern.permute.xlu0 2
    %1029 = vperm.xlu0 %1028, %v59
    %v1030 = vpop.permute.xlu0 %1029
    %1031 = vset.pattern.permute.xlu0 2
    %1032 = vperm.xlu0 %1031, %v60
    %v1033 = vpop.permute.xlu0 %1032
    %1034 = vset.pattern.permute.xlu0 2
    %1035 = vperm.xlu0 %1034, %v61
    %v1036 = vpop.permute.xlu0 %1035
    %1037 = vset.pattern.permute.xlu0 2
    %1038 = vperm.xlu0 %1037, %v62
    %v1039 = vpop.permute.xlu0 %1038
    %1040 = vset.pattern.permute.xlu0 2
    %1041 = vperm.xlu0 %1040, %v63
    %v1042 = vpop.permute.xlu0 %1041
    %1043 = vset.pattern.permute.xlu0 2
    %1044 = vperm.xlu0 %1043, %v64
    %v1045 = vpop.permute.xlu0 %1044
    %vm1046 = vcmp.eq.s32.totalorder %v66, %v1000
    %vm1047 = vcmp.eq.s32.totalorder %v67, %v1000
    %vm1048 = vcmp.eq.s32.totalorder %v66, %v1003
    %vm1049 = vcmp.eq.s32.totalorder %v67, %v1003
    %vm1050 = vcmp.eq.s32.totalorder %v66, %v1006
    %vm1051 = vcmp.eq.s32.totalorder %v67, %v1006
    %vm1052 = vcmp.eq.s32.totalorder %v66, %v1009
    %vm1053 = vcmp.eq.s32.totalorder %v67, %v1009
    %vm1054 = vcmp.eq.s32.totalorder %v66, %v1012
    %vm1055 = vcmp.eq.s32.totalorder %v67, %v1012
    %vm1056 = vcmp.eq.s32.totalorder %v66, %v1015
    %vm1057 = vcmp.eq.s32.totalorder %v67, %v1015
    %vm1058 = vcmp.eq.s32.totalorder %v66, %v1018
    %vm1059 = vcmp.eq.s32.totalorder %v67, %v1018
    %vm1060 = vcmp.eq.s32.totalorder %v66, %v1021
    %vm1061 = vcmp.eq.s32.totalorder %v67, %v1021
    %vm1062 = vcmp.eq.s32.totalorder %v66, %v1024
    %vm1063 = vcmp.eq.s32.totalorder %v67, %v1024
    %vm1064 = vcmp.eq.s32.totalorder %v66, %v1027
    %vm1065 = vcmp.eq.s32.totalorder %v67, %v1027
    %vm1066 = vcmp.eq.s32.totalorder %v66, %v1030
    %vm1067 = vcmp.eq.s32.totalorder %v67, %v1030
    %vm1068 = vcmp.eq.s32.totalorder %v66, %v1033
    %vm1069 = vcmp.eq.s32.totalorder %v67, %v1033
    %vm1070 = vcmp.eq.s32.totalorder %v66, %v1036
    %vm1071 = vcmp.eq.s32.totalorder %v67, %v1036
    %vm1072 = vcmp.eq.s32.totalorder %v66, %v1039
    %vm1073 = vcmp.eq.s32.totalorder %v67, %v1039
    %vm1074 = vcmp.eq.s32.totalorder %v66, %v1042
    %vm1075 = vcmp.eq.s32.totalorder %v67, %v1042
    %vm1076 = vcmp.eq.s32.totalorder %v66, %v1045
    %vm1077 = vcmp.eq.s32.totalorder %v67, %v1045
    %v1078 = vsel %vm1046, 1, 0
    %v1079 = vsel %vm1047, 1, 0
    %v1080 = vsel %vm1048, 1, 0
    %v1081 = vsel %vm1049, 1, 0
    %v1082 = vsel %vm1050, 1, 0
    %v1083 = vsel %vm1051, 1, 0
    %v1084 = vsel %vm1052, 1, 0
    %v1085 = vsel %vm1053, 1, 0
    %v1086 = vsel %vm1054, 1, 0
    %v1087 = vsel %vm1055, 1, 0
    %v1088 = vsel %vm1056, 1, 0
    %v1089 = vsel %vm1057, 1, 0
    %v1090 = vsel %vm1058, 1, 0
    %v1091 = vsel %vm1059, 1, 0
    %v1092 = vsel %vm1060, 1, 0
    %v1093 = vsel %vm1061, 1, 0
    %v1094 = vsel %vm1062, 1, 0
    %v1095 = vsel %vm1063, 1, 0
    %v1096 = vsel %vm1064, 1, 0
    %v1097 = vsel %vm1065, 1, 0
    %v1098 = vsel %vm1066, 1, 0
    %v1099 = vsel %vm1067, 1, 0
    %v1100 = vsel %vm1068, 1, 0
    %v1101 = vsel %vm1069, 1, 0
    %v1102 = vsel %vm1070, 1, 0
    %v1103 = vsel %vm1071, 1, 0
    %v1104 = vsel %vm1072, 1, 0
    %v1105 = vsel %vm1073, 1, 0
    %v1106 = vsel %vm1074, 1, 0
    %v1107 = vsel %vm1075, 1, 0
    %v1108 = vsel %vm1076, 1, 0
    %v1109 = vsel %vm1077, 1, 0
    %v1110 = vcvt.s32.f32 %v1078
    %v1111 = vcvt.s32.f32 %v1079
    %v1112 = vcvt.s32.f32 %v1080
    %v1113 = vcvt.s32.f32 %v1081
    %v1114 = vcvt.s32.f32 %v1082
    %v1115 = vcvt.s32.f32 %v1083
    %v1116 = vcvt.s32.f32 %v1084
    %v1117 = vcvt.s32.f32 %v1085
    %v1118 = vcvt.s32.f32 %v1086
    %v1119 = vcvt.s32.f32 %v1087
    %v1120 = vcvt.s32.f32 %v1088
    %v1121 = vcvt.s32.f32 %v1089
    %v1122 = vcvt.s32.f32 %v1090
    %v1123 = vcvt.s32.f32 %v1091
    %v1124 = vcvt.s32.f32 %v1092
    %v1125 = vcvt.s32.f32 %v1093
    %v1126 = vcvt.s32.f32 %v1094
    %v1127 = vcvt.s32.f32 %v1095
    %v1128 = vcvt.s32.f32 %v1096
    %v1129 = vcvt.s32.f32 %v1097
    %v1130 = vcvt.s32.f32 %v1098
    %v1131 = vcvt.s32.f32 %v1099
    %v1132 = vcvt.s32.f32 %v1100
    %v1133 = vcvt.s32.f32 %v1101
    %v1134 = vcvt.s32.f32 %v1102
    %v1135 = vcvt.s32.f32 %v1103
    %v1136 = vcvt.s32.f32 %v1104
    %v1137 = vcvt.s32.f32 %v1105
    %v1138 = vcvt.s32.f32 %v1106
    %v1139 = vcvt.s32.f32 %v1107
    %v1140 = vcvt.s32.f32 %v1108
    %v1141 = vcvt.s32.f32 %v1109
    %v1142 = vpack.c.bf16 %v1112, %v1110
    %v1143 = vpack.c.bf16 %v1113, %v1111
    %v1144 = vpack.c.bf16 %v1116, %v1114
    %v1145 = vpack.c.bf16 %v1117, %v1115
    %v1146 = vpack.c.bf16 %v1120, %v1118
    %v1147 = vpack.c.bf16 %v1121, %v1119
    %v1148 = vpack.c.bf16 %v1124, %v1122
    %v1149 = vpack.c.bf16 %v1125, %v1123
    %v1150 = vpack.c.bf16 %v1128, %v1126
    %v1151 = vpack.c.bf16 %v1129, %v1127
    %v1152 = vpack.c.bf16 %v1132, %v1130
    %v1153 = vpack.c.bf16 %v1133, %v1131
    %v1154 = vpack.c.bf16 %v1136, %v1134
    %v1155 = vpack.c.bf16 %v1137, %v1135
    %v1156 = vpack.c.bf16 %v1140, %v1138
    %v1157 = vpack.c.bf16 %v1141, %v1139
    %v1158 = vld [vmem:[#allocation2 + $0x200] sm:$0xff]
    %v1159 = vld [vmem:[#allocation2 + $0x208] sm:$0xff]
    %v1160 = vld [vmem:[#allocation2 + $0x210] sm:$0xff]
    %v1161 = vld [vmem:[#allocation2 + $0x218] sm:$0xff]
    %v1162 = vld [vmem:[#allocation2 + $0x220] sm:$0xff]
    %v1163 = vld [vmem:[#allocation2 + $0x228] sm:$0xff]
    %v1164 = vld [vmem:[#allocation2 + $0x230] sm:$0xff]
    %v1165 = vld [vmem:[#allocation2 + $0x238] sm:$0xff]
    %v1166 = vld [vmem:[#allocation2 + $0x240] sm:$0xff]
    %v1167 = vld [vmem:[#allocation2 + $0x248] sm:$0xff]
    %v1168 = vld [vmem:[#allocation2 + $0x250] sm:$0xff]
    %v1169 = vld [vmem:[#allocation2 + $0x258] sm:$0xff]
    %v1170 = vld [vmem:[#allocation2 + $0x260] sm:$0xff]
    %v1171 = vld [vmem:[#allocation2 + $0x268] sm:$0xff]
    %v1172 = vld [vmem:[#allocation2 + $0x270] sm:$0xff]
    %v1173 = vld [vmem:[#allocation2 + $0x278] sm:$0xff]
    %v1174 = vld [vmem:[#allocation2 + $0x280] sm:$0xff]
    %v1175 = vld [vmem:[#allocation2 + $0x288] sm:$0xff]
    %v1176 = vld [vmem:[#allocation2 + $0x290] sm:$0xff]
    %v1177 = vld [vmem:[#allocation2 + $0x298] sm:$0xff]
    %v1178 = vld [vmem:[#allocation2 + $0x2a0] sm:$0xff]
    %v1179 = vld [vmem:[#allocation2 + $0x2a8] sm:$0xff]
    %v1180 = vld [vmem:[#allocation2 + $0x2b0] sm:$0xff]
    %v1181 = vld [vmem:[#allocation2 + $0x2b8] sm:$0xff]
    %v1182 = vld [vmem:[#allocation2 + $0x2c0] sm:$0xff]
    %v1183 = vld [vmem:[#allocation2 + $0x2c8] sm:$0xff]
    %v1184 = vld [vmem:[#allocation2 + $0x2d0] sm:$0xff]
    %v1185 = vld [vmem:[#allocation2 + $0x2d8] sm:$0xff]
    %v1186 = vld [vmem:[#allocation2 + $0x2e0] sm:$0xff]
    %v1187 = vld [vmem:[#allocation2 + $0x2e8] sm:$0xff]
    %v1188 = vld [vmem:[#allocation2 + $0x2f0] sm:$0xff]
    %v1189 = vld [vmem:[#allocation2 + $0x2f8] sm:$0xff]
    %v1222 = vunpack.c.l.b16 %v1158
    %v1223 = vunpack.c.h.b16 %v1158
    %v1224 = vunpack.c.l.b16 %v1159
    %v1225 = vunpack.c.h.b16 %v1159
    %v1226 = vunpack.c.l.b16 %v1160
    %v1227 = vunpack.c.h.b16 %v1160
    %v1228 = vunpack.c.l.b16 %v1161
    %v1229 = vunpack.c.h.b16 %v1161
    %v1230 = vunpack.c.l.b16 %v1162
    %v1231 = vunpack.c.h.b16 %v1162
    %v1232 = vunpack.c.l.b16 %v1163
    %v1233 = vunpack.c.h.b16 %v1163
    %v1234 = vunpack.c.l.b16 %v1164
    %v1235 = vunpack.c.h.b16 %v1164
    %v1236 = vunpack.c.l.b16 %v1165
    %v1237 = vunpack.c.h.b16 %v1165
    %v1238 = vunpack.c.l.b16 %v1166
    %v1239 = vunpack.c.h.b16 %v1166
    %v1240 = vunpack.c.l.b16 %v1167
    %v1241 = vunpack.c.h.b16 %v1167
    %v1242 = vunpack.c.l.b16 %v1168
    %v1243 = vunpack.c.h.b16 %v1168
    %v1244 = vunpack.c.l.b16 %v1169
    %v1245 = vunpack.c.h.b16 %v1169
    %v1246 = vunpack.c.l.b16 %v1170
    %v1247 = vunpack.c.h.b16 %v1170
    %v1248 = vunpack.c.l.b16 %v1171
    %v1249 = vunpack.c.h.b16 %v1171
    %v1250 = vunpack.c.l.b16 %v1172
    %v1251 = vunpack.c.h.b16 %v1172
    %v1252 = vunpack.c.l.b16 %v1173
    %v1253 = vunpack.c.h.b16 %v1173
    %v1254 = vunpack.c.l.b16 %v1174
    %v1255 = vunpack.c.h.b16 %v1174
    %v1256 = vunpack.c.l.b16 %v1175
    %v1257 = vunpack.c.h.b16 %v1175
    %v1258 = vunpack.c.l.b16 %v1176
    %v1259 = vunpack.c.h.b16 %v1176
    %v1260 = vunpack.c.l.b16 %v1177
    %v1261 = vunpack.c.h.b16 %v1177
    %v1262 = vunpack.c.l.b16 %v1178
    %v1263 = vunpack.c.h.b16 %v1178
    %v1264 = vunpack.c.l.b16 %v1179
    %v1265 = vunpack.c.h.b16 %v1179
    %v1266 = vunpack.c.l.b16 %v1180
    %v1267 = vunpack.c.h.b16 %v1180
    %v1268 = vunpack.c.l.b16 %v1181
    %v1269 = vunpack.c.h.b16 %v1181
    %v1270 = vunpack.c.l.b16 %v1182
    %v1271 = vunpack.c.h.b16 %v1182
    %v1272 = vunpack.c.l.b16 %v1183
    %v1273 = vunpack.c.h.b16 %v1183
    %v1274 = vunpack.c.l.b16 %v1184
    %v1275 = vunpack.c.h.b16 %v1184
    %v1276 = vunpack.c.l.b16 %v1185
    %v1277 = vunpack.c.h.b16 %v1185
    %v1278 = vunpack.c.l.b16 %v1186
    %v1279 = vunpack.c.h.b16 %v1186
    %v1280 = vunpack.c.l.b16 %v1187
    %v1281 = vunpack.c.h.b16 %v1187
    %v1282 = vunpack.c.l.b16 %v1188
    %v1283 = vunpack.c.h.b16 %v1188
    %v1284 = vunpack.c.l.b16 %v1189
    %v1285 = vunpack.c.h.b16 %v1189
    %v1286 = vpack.c.b16 %v1224, %v1222
    %v1287 = vpack.c.b16 %v1225, %v1223
    %v1288 = vpack.c.b16 %v1228, %v1226
    %v1289 = vpack.c.b16 %v1229, %v1227
    %v1290 = vpack.c.b16 %v1232, %v1230
    %v1291 = vpack.c.b16 %v1233, %v1231
    %v1292 = vpack.c.b16 %v1236, %v1234
    %v1293 = vpack.c.b16 %v1237, %v1235
    %v1294 = vpack.c.b16 %v1240, %v1238
    %v1295 = vpack.c.b16 %v1241, %v1239
    %v1296 = vpack.c.b16 %v1244, %v1242
    %v1297 = vpack.c.b16 %v1245, %v1243
    %v1298 = vpack.c.b16 %v1248, %v1246
    %v1299 = vpack.c.b16 %v1249, %v1247
    %v1300 = vpack.c.b16 %v1252, %v1250
    %v1301 = vpack.c.b16 %v1253, %v1251
    %v1302 = vpack.c.b16 %v1256, %v1254
    %v1303 = vpack.c.b16 %v1257, %v1255
    %v1304 = vpack.c.b16 %v1260, %v1258
    %v1305 = vpack.c.b16 %v1261, %v1259
    %v1306 = vpack.c.b16 %v1264, %v1262
    %v1307 = vpack.c.b16 %v1265, %v1263
    %v1308 = vpack.c.b16 %v1268, %v1266
    %v1309 = vpack.c.b16 %v1269, %v1267
    %v1310 = vpack.c.b16 %v1272, %v1270
    %v1311 = vpack.c.b16 %v1273, %v1271
    %v1312 = vpack.c.b16 %v1276, %v1274
    %v1313 = vpack.c.b16 %v1277, %v1275
    %v1314 = vpack.c.b16 %v1280, %v1278
    %v1315 = vpack.c.b16 %v1281, %v1279
    %v1316 = vpack.c.b16 %v1284, %v1282
    %v1317 = vpack.c.b16 %v1285, %v1283
    %1350 = vmatprep.subr.bf16.mxu0 %v1287
    %1351 = vmatpush1.bf16.msra.mxu0 %v1286
    %1352 = vmatprep.subr.bf16.mxu0 %v1289
    %1353 = vmatpush1.bf16.msra.mxu0 %v1288
    %1354 = vmatprep.subr.bf16.mxu0 %v1291
    %1355 = vmatpush1.bf16.msra.mxu0 %v1290
    %1356 = vmatprep.subr.bf16.mxu0 %v1293
    %1357 = vmatpush1.bf16.msra.mxu0 %v1292
    %1358 = vmatprep.subr.bf16.mxu0 %v1295
    %1359 = vmatpush1.bf16.msra.mxu0 %v1294
    %1360 = vmatprep.subr.bf16.mxu0 %v1297
    %1361 = vmatpush1.bf16.msra.mxu0 %v1296
    %1362 = vmatprep.subr.bf16.mxu0 %v1299
    %1363 = vmatpush1.bf16.msra.mxu0 %v1298
    %1364 = vmatprep.subr.bf16.mxu0 %v1301
    %1365 = vmatpush1.bf16.msra.mxu0 %v1300
    %1366 = vmatprep.subr.bf16.mxu0 %v1303
    %1367 = vmatpush1.bf16.msra.mxu0 %v1302
    %1368 = vmatprep.subr.bf16.mxu0 %v1305
    %1369 = vmatpush1.bf16.msra.mxu0 %v1304
    %1370 = vmatprep.subr.bf16.mxu0 %v1307
    %1371 = vmatpush1.bf16.msra.mxu0 %v1306
    %1372 = vmatprep.subr.bf16.mxu0 %v1309
    %1373 = vmatpush1.bf16.msra.mxu0 %v1308
    %1374 = vmatprep.subr.bf16.mxu0 %v1311
    %1375 = vmatpush1.bf16.msra.mxu0 %v1310
    %1376 = vmatprep.subr.bf16.mxu0 %v1313
    %1377 = vmatpush1.bf16.msra.mxu0 %v1312
    %1378 = vmatprep.subr.bf16.mxu0 %v1315
    %1379 = vmatpush1.bf16.msra.mxu0 %v1314
    %1380 = vmatprep.subr.bf16.mxu0 %v1317
    %1381 = vmatpush1.bf16.msra.mxu0 %v1316
    %1382 = vmatprep.mubr.bf16.mxu0 %v1143
    %1383 = vmatmul.mubr.bf16.gmra.mrb[0].mxu0 %v1142
    %v1384 = vpop.f32.mrb[0].mxu0
    %v1385 = vadd.f32 0.0, %v1384
    %v1386 = vpop.f32.mrb[0].mxu0
    %v1387 = vadd.f32 0.0, %v1386
    %v1388 = vpop.f32.mrb[0].mxu0
    %v1389 = vadd.f32 0.0, %v1388
    %v1390 = vpop.f32.mrb[0].mxu0
    %v1391 = vadd.f32 0.0, %v1390
    %1392 = vmatprep.mubr.bf16.mxu0 %v1145
    %1393 = vmatmul.mubr.bf16.gmra.mrb[0].mxu0 %v1144
    %v1394 = vpop.f32.mrb[0].mxu0
    %v1395 = vadd.f32 0.0, %v1394
    %v1396 = vpop.f32.mrb[0].mxu0
    %v1397 = vadd.f32 0.0, %v1396
    %v1398 = vpop.f32.mrb[0].mxu0
    %v1399 = vadd.f32 0.0, %v1398
    %v1400 = vpop.f32.mrb[0].mxu0
    %v1401 = vadd.f32 0.0, %v1400
    %1402 = vmatprep.mubr.bf16.mxu0 %v1147
    %1403 = vmatmul.mubr.bf16.gmra.mrb[0].mxu0 %v1146
    %v1404 = vpop.f32.mrb[0].mxu0
    %v1405 = vadd.f32 0.0, %v1404
    %v1406 = vpop.f32.mrb[0].mxu0
    %v1407 = vadd.f32 0.0, %v1406
    %v1408 = vpop.f32.mrb[0].mxu0
    %v1409 = vadd.f32 0.0, %v1408
    %v1410 = vpop.f32.mrb[0].mxu0
    %v1411 = vadd.f32 0.0, %v1410
    %1412 = vmatprep.mubr.bf16.mxu0 %v1149
    %1413 = vmatmul.mubr.bf16.gmra.mrb[0].mxu0 %v1148
    %v1414 = vpop.f32.mrb[0].mxu0
    %v1415 = vadd.f32 0.0, %v1414
    %v1416 = vpop.f32.mrb[0].mxu0
    %v1417 = vadd.f32 0.0, %v1416
    %v1418 = vpop.f32.mrb[0].mxu0
    %v1419 = vadd.f32 0.0, %v1418
    %v1420 = vpop.f32.mrb[0].mxu0
    %v1421 = vadd.f32 0.0, %v1420
    %1422 = vmatprep.mubr.bf16.mxu0 %v1151
    %1423 = vmatmul.mubr.bf16.gmra.mrb[0].mxu0 %v1150
    %v1424 = vpop.f32.mrb[0].mxu0
    %v1425 = vadd.f32 0.0, %v1424
    %v1426 = vpop.f32.mrb[0].mxu0
    %v1427 = vadd.f32 0.0, %v1426
    %v1428 = vpop.f32.mrb[0].mxu0
    %v1429 = vadd.f32 0.0, %v1428
    %v1430 = vpop.f32.mrb[0].mxu0
    %v1431 = vadd.f32 0.0, %v1430
    %1432 = vmatprep.mubr.bf16.mxu0 %v1153
    %1433 = vmatmul.mubr.bf16.gmra.mrb[0].mxu0 %v1152
    %v1434 = vpop.f32.mrb[0].mxu0
    %v1435 = vadd.f32 0.0, %v1434
    %v1436 = vpop.f32.mrb[0].mxu0
    %v1437 = vadd.f32 0.0, %v1436
    %v1438 = vpop.f32.mrb[0].mxu0
    %v1439 = vadd.f32 0.0, %v1438
    %v1440 = vpop.f32.mrb[0].mxu0
    %v1441 = vadd.f32 0.0, %v1440
    %1442 = vmatprep.mubr.bf16.mxu0 %v1155
    %1443 = vmatmul.mubr.bf16.gmra.mrb[0].mxu0 %v1154
    %v1444 = vpop.f32.mrb[0].mxu0
    %v1445 = vadd.f32 0.0, %v1444
    %v1446 = vpop.f32.mrb[0].mxu0
    %v1447 = vadd.f32 0.0, %v1446
    %v1448 = vpop.f32.mrb[0].mxu0
    %v1449 = vadd.f32 0.0, %v1448
    %v1450 = vpop.f32.mrb[0].mxu0
    %v1451 = vadd.f32 0.0, %v1450
    %1452 = vmatprep.mubr.bf16.mxu0 %v1157
    %1453 = vmatmul.mubr.bf16.gmra.mrb[0].mxu0 %v1156
    %v1454 = vpop.f32.mrb[0].mxu0
    %v1455 = vadd.f32 0.0, %v1454
    %v1456 = vpop.f32.mrb[0].mxu0
    %v1457 = vadd.f32 0.0, %v1456
    %v1458 = vpop.f32.mrb[0].mxu0
    %v1459 = vadd.f32 0.0, %v1458
    %v1460 = vpop.f32.mrb[0].mxu0
    %v1461 = vadd.f32 0.0, %v1460
    %1462 = vdwg.mxu0
    %v1463 = vadd.f32 %v920, %v1385
    %v1464 = vadd.f32 %v922, %v1387
    %v1465 = vadd.f32 %v924, %v1389
    %v1466 = vadd.f32 %v926, %v1391
    %v1467 = vadd.f32 %v930, %v1395
    %v1468 = vadd.f32 %v932, %v1397
    %v1469 = vadd.f32 %v934, %v1399
    %v1470 = vadd.f32 %v936, %v1401
    %v1471 = vadd.f32 %v940, %v1405
    %v1472 = vadd.f32 %v942, %v1407
    %v1473 = vadd.f32 %v944, %v1409
    %v1474 = vadd.f32 %v946, %v1411
    %v1475 = vadd.f32 %v950, %v1415
    %v1476 = vadd.f32 %v952, %v1417
    %v1477 = vadd.f32 %v954, %v1419
    %v1478 = vadd.f32 %v956, %v1421
    %v1479 = vadd.f32 %v960, %v1425
    %v1480 = vadd.f32 %v962, %v1427
    %v1481 = vadd.f32 %v964, %v1429
    %v1482 = vadd.f32 %v966, %v1431
    %v1483 = vadd.f32 %v970, %v1435
    %v1484 = vadd.f32 %v972, %v1437
    %v1485 = vadd.f32 %v974, %v1439
    %v1486 = vadd.f32 %v976, %v1441
    %v1487 = vadd.f32 %v980, %v1445
    %v1488 = vadd.f32 %v982, %v1447
    %v1489 = vadd.f32 %v984, %v1449
    %v1490 = vadd.f32 %v986, %v1451
    %v1491 = vadd.f32 %v990, %v1455
    %v1492 = vadd.f32 %v992, %v1457
    %v1493 = vadd.f32 %v994, %v1459
    %v1494 = vadd.f32 %v996, %v1461
    %v1495 = vld [vmem:[%s2] sm:$0x3]
    %v1497 = vlaneseq
    %v1498 = vshrl.u32 %v1497, 7
    %v1499 = vsub.s32 0, %v1498
    %v1500 = vrot.slane %v1495, %v1499
    %v1501 = vlaneseq
    %v1502 = vshrl.u32 %v1501, 7
    %v1503 = vsub.s32 1, %v1502
    %v1504 = vrot.slane %v1495, %v1503
    %v1507 = vadd.f32 %v1463, %v1500
    %v1508 = vadd.f32 %v1464, %v1504
    %v1509 = vadd.f32 %v1465, %v1500
    %v1510 = vadd.f32 %v1466, %v1504
    %v1511 = vadd.f32 %v1467, %v1500
    %v1512 = vadd.f32 %v1468, %v1504
    %v1513 = vadd.f32 %v1469, %v1500
    %v1514 = vadd.f32 %v1470, %v1504
    %v1515 = vadd.f32 %v1471, %v1500
    %v1516 = vadd.f32 %v1472, %v1504
    %v1517 = vadd.f32 %v1473, %v1500
    %v1518 = vadd.f32 %v1474, %v1504
    %v1519 = vadd.f32 %v1475, %v1500
    %v1520 = vadd.f32 %v1476, %v1504
    %v1521 = vadd.f32 %v1477, %v1500
    %v1522 = vadd.f32 %v1478, %v1504
    %v1523 = vadd.f32 %v1479, %v1500
    %v1524 = vadd.f32 %v1480, %v1504
    %v1525 = vadd.f32 %v1481, %v1500
    %v1526 = vadd.f32 %v1482, %v1504
    %v1527 = vadd.f32 %v1483, %v1500
    %v1528 = vadd.f32 %v1484, %v1504
    %v1529 = vadd.f32 %v1485, %v1500
    %v1530 = vadd.f32 %v1486, %v1504
    %v1531 = vadd.f32 %v1487, %v1500
    %v1532 = vadd.f32 %v1488, %v1504
    %v1533 = vadd.f32 %v1489, %v1500
    %v1534 = vadd.f32 %v1490, %v1504
    %v1535 = vadd.f32 %v1491, %v1500
    %v1536 = vadd.f32 %v1492, %v1504
    %v1537 = vadd.f32 %v1493, %v1500
    %v1538 = vadd.f32 %v1494, %v1504
    %v1539 = vmax.f32 %v1507, 0.0
    %v1540 = vmax.f32 %v1508, 0.0
    %v1541 = vmax.f32 %v1509, 0.0
    %v1542 = vmax.f32 %v1510, 0.0
    %v1543 = vmax.f32 %v1511, 0.0
    %v1544 = vmax.f32 %v1512, 0.0
    %v1545 = vmax.f32 %v1513, 0.0
    %v1546 = vmax.f32 %v1514, 0.0
    %v1547 = vmax.f32 %v1515, 0.0
    %v1548 = vmax.f32 %v1516, 0.0
    %v1549 = vmax.f32 %v1517, 0.0
    %v1550 = vmax.f32 %v1518, 0.0
    %v1551 = vmax.f32 %v1519, 0.0
    %v1552 = vmax.f32 %v1520, 0.0
    %v1553 = vmax.f32 %v1521, 0.0
    %v1554 = vmax.f32 %v1522, 0.0
    %v1555 = vmax.f32 %v1523, 0.0
    %v1556 = vmax.f32 %v1524, 0.0
    %v1557 = vmax.f32 %v1525, 0.0
    %v1558 = vmax.f32 %v1526, 0.0
    %v1559 = vmax.f32 %v1527, 0.0
    %v1560 = vmax.f32 %v1528, 0.0
    %v1561 = vmax.f32 %v1529, 0.0
    %v1562 = vmax.f32 %v1530, 0.0
    %v1563 = vmax.f32 %v1531, 0.0
    %v1564 = vmax.f32 %v1532, 0.0
    %v1565 = vmax.f32 %v1533, 0.0
    %v1566 = vmax.f32 %v1534, 0.0
    %v1567 = vmax.f32 %v1535, 0.0
    %v1568 = vmax.f32 %v1536, 0.0
    %v1569 = vmax.f32 %v1537, 0.0
    %v1570 = vmax.f32 %v1538, 0.0
    %v1571 = vpack.c.bf16 %v1541, %v1539
    %v1572 = vpack.c.bf16 %v1542, %v1540
    %v1573 = vpack.c.bf16 %v1545, %v1543
    %v1574 = vpack.c.bf16 %v1546, %v1544
    %v1575 = vpack.c.bf16 %v1549, %v1547
    %v1576 = vpack.c.bf16 %v1550, %v1548
    %v1577 = vpack.c.bf16 %v1553, %v1551
    %v1578 = vpack.c.bf16 %v1554, %v1552
    %v1579 = vpack.c.bf16 %v1557, %v1555
    %v1580 = vpack.c.bf16 %v1558, %v1556
    %v1581 = vpack.c.bf16 %v1561, %v1559
    %v1582 = vpack.c.bf16 %v1562, %v1560
    %v1583 = vpack.c.bf16 %v1565, %v1563
    %v1584 = vpack.c.bf16 %v1566, %v1564
    %v1585 = vpack.c.bf16 %v1569, %v1567
    %v1586 = vpack.c.bf16 %v1570, %v1568
    %v1587 = vld [vmem:[#allocation5] sm:$0xff]
    %v1588 = vld [vmem:[#allocation5 + $0x8] sm:$0xff]
    %v1589 = vld [vmem:[#allocation5 + $0x10] sm:$0xff]
    %v1590 = vld [vmem:[#allocation5 + $0x18] sm:$0xff]
    %v1591 = vld [vmem:[#allocation5 + $0x20] sm:$0xff]
    %v1592 = vld [vmem:[#allocation5 + $0x28] sm:$0xff]
    %v1593 = vld [vmem:[#allocation5 + $0x30] sm:$0xff]
    %v1594 = vld [vmem:[#allocation5 + $0x38] sm:$0xff]
    %v1595 = vld [vmem:[#allocation5 + $0x40] sm:$0xff]
    %v1596 = vld [vmem:[#allocation5 + $0x48] sm:$0xff]
    %v1597 = vld [vmem:[#allocation5 + $0x50] sm:$0xff]
    %v1598 = vld [vmem:[#allocation5 + $0x58] sm:$0xff]
    %v1599 = vld [vmem:[#allocation5 + $0x60] sm:$0xff]
    %v1600 = vld [vmem:[#allocation5 + $0x68] sm:$0xff]
    %v1601 = vld [vmem:[#allocation5 + $0x70] sm:$0xff]
    %v1602 = vld [vmem:[#allocation5 + $0x78] sm:$0xff]
    %v1603 = vld [vmem:[#allocation5 + $0x80] sm:$0xff]
    %v1604 = vld [vmem:[#allocation5 + $0x88] sm:$0xff]
    %v1605 = vld [vmem:[#allocation5 + $0x90] sm:$0xff]
    %v1606 = vld [vmem:[#allocation5 + $0x98] sm:$0xff]
    %v1607 = vld [vmem:[#allocation5 + $0xa0] sm:$0xff]
    %v1608 = vld [vmem:[#allocation5 + $0xa8] sm:$0xff]
    %v1609 = vld [vmem:[#allocation5 + $0xb0] sm:$0xff]
    %v1610 = vld [vmem:[#allocation5 + $0xb8] sm:$0xff]
    %v1611 = vld [vmem:[#allocation5 + $0xc0] sm:$0xff]
    %v1612 = vld [vmem:[#allocation5 + $0xc8] sm:$0xff]
    %v1613 = vld [vmem:[#allocation5 + $0xd0] sm:$0xff]
    %v1614 = vld [vmem:[#allocation5 + $0xd8] sm:$0xff]
    %v1615 = vld [vmem:[#allocation5 + $0xe0] sm:$0xff]
    %v1616 = vld [vmem:[#allocation5 + $0xe8] sm:$0xff]
    %v1617 = vld [vmem:[#allocation5 + $0xf0] sm:$0xff]
    %v1618 = vld [vmem:[#allocation5 + $0xf8] sm:$0xff]
    %v1619 = vld [vmem:[%s4] sm:$0x3]
    %v1621 = vlaneseq
    %v1622 = vshrl.u32 %v1621, 7
    %v1623 = vsub.s32 0, %v1622
    %v1624 = vrot.slane %v1619, %v1623
    %v1625 = vlaneseq
    %v1626 = vshrl.u32 %v1625, 7
    %v1627 = vsub.s32 1, %v1626
    %v1628 = vrot.slane %v1619, %v1627
    %v1663 = vunpack.c.l.b16 %v1587
    %v1664 = vunpack.c.h.b16 %v1587
    %v1665 = vunpack.c.l.b16 %v1588
    %v1666 = vunpack.c.h.b16 %v1588
    %v1667 = vunpack.c.l.b16 %v1589
    %v1668 = vunpack.c.h.b16 %v1589
    %v1669 = vunpack.c.l.b16 %v1590
    %v1670 = vunpack.c.h.b16 %v1590
    %v1671 = vunpack.c.l.b16 %v1591
    %v1672 = vunpack.c.h.b16 %v1591
    %v1673 = vunpack.c.l.b16 %v1592
    %v1674 = vunpack.c.h.b16 %v1592
    %v1675 = vunpack.c.l.b16 %v1593
    %v1676 = vunpack.c.h.b16 %v1593
    %v1677 = vunpack.c.l.b16 %v1594
    %v1678 = vunpack.c.h.b16 %v1594
    %v1679 = vunpack.c.l.b16 %v1595
    %v1680 = vunpack.c.h.b16 %v1595
    %v1681 = vunpack.c.l.b16 %v1596
    %v1682 = vunpack.c.h.b16 %v1596
    %v1683 = vunpack.c.l.b16 %v1597
    %v1684 = vunpack.c.h.b16 %v1597
    %v1685 = vunpack.c.l.b16 %v1598
    %v1686 = vunpack.c.h.b16 %v1598
    %v1687 = vunpack.c.l.b16 %v1599
    %v1688 = vunpack.c.h.b16 %v1599
    %v1689 = vunpack.c.l.b16 %v1600
    %v1690 = vunpack.c.h.b16 %v1600
    %v1691 = vunpack.c.l.b16 %v1601
    %v1692 = vunpack.c.h.b16 %v1601
    %v1693 = vunpack.c.l.b16 %v1602
    %v1694 = vunpack.c.h.b16 %v1602
    %v1695 = vunpack.c.l.b16 %v1603
    %v1696 = vunpack.c.h.b16 %v1603
    %v1697 = vunpack.c.l.b16 %v1604
    %v1698 = vunpack.c.h.b16 %v1604
    %v1699 = vunpack.c.l.b16 %v1605
    %v1700 = vunpack.c.h.b16 %v1605
    %v1701 = vunpack.c.l.b16 %v1606
    %v1702 = vunpack.c.h.b16 %v1606
    %v1703 = vunpack.c.l.b16 %v1607
    %v1704 = vunpack.c.h.b16 %v1607
    %v1705 = vunpack.c.l.b16 %v1608
    %v1706 = vunpack.c.h.b16 %v1608
    %v1707 = vunpack.c.l.b16 %v1609
    %v1708 = vunpack.c.h.b16 %v1609
    %v1709 = vunpack.c.l.b16 %v1610
    %v1710 = vunpack.c.h.b16 %v1610
    %v1711 = vunpack.c.l.b16 %v1611
    %v1712 = vunpack.c.h.b16 %v1611
    %v1713 = vunpack.c.l.b16 %v1612
    %v1714 = vunpack.c.h.b16 %v1612
    %v1715 = vunpack.c.l.b16 %v1613
    %v1716 = vunpack.c.h.b16 %v1613
    %v1717 = vunpack.c.l.b16 %v1614
    %v1718 = vunpack.c.h.b16 %v1614
    %v1719 = vunpack.c.l.b16 %v1615
    %v1720 = vunpack.c.h.b16 %v1615
    %v1721 = vunpack.c.l.b16 %v1616
    %v1722 = vunpack.c.h.b16 %v1616
    %v1723 = vunpack.c.l.b16 %v1617
    %v1724 = vunpack.c.h.b16 %v1617
    %v1725 = vunpack.c.l.b16 %v1618
    %v1726 = vunpack.c.h.b16 %v1618
    %v1727 = vpack.c.b16 %v1665, %v1663
    %v1728 = vpack.c.b16 %v1666, %v1664
    %v1729 = vpack.c.b16 %v1669, %v1667
    %v1730 = vpack.c.b16 %v1670, %v1668
    %v1731 = vpack.c.b16 %v1673, %v1671
    %v1732 = vpack.c.b16 %v1674, %v1672
    %v1733 = vpack.c.b16 %v1677, %v1675
    %v1734 = vpack.c.b16 %v1678, %v1676
    %v1735 = vpack.c.b16 %v1681, %v1679
    %v1736 = vpack.c.b16 %v1682, %v1680
    %v1737 = vpack.c.b16 %v1685, %v1683
    %v1738 = vpack.c.b16 %v1686, %v1684
    %v1739 = vpack.c.b16 %v1689, %v1687
    %v1740 = vpack.c.b16 %v1690, %v1688
    %v1741 = vpack.c.b16 %v1693, %v1691
    %v1742 = vpack.c.b16 %v1694, %v1692
    %v1743 = vpack.c.b16 %v1697, %v1695
    %v1744 = vpack.c.b16 %v1698, %v1696
    %v1745 = vpack.c.b16 %v1701, %v1699
    %v1746 = vpack.c.b16 %v1702, %v1700
    %v1747 = vpack.c.b16 %v1705, %v1703
    %v1748 = vpack.c.b16 %v1706, %v1704
    %v1749 = vpack.c.b16 %v1709, %v1707
    %v1750 = vpack.c.b16 %v1710, %v1708
    %v1751 = vpack.c.b16 %v1713, %v1711
    %v1752 = vpack.c.b16 %v1714, %v1712
    %v1753 = vpack.c.b16 %v1717, %v1715
    %v1754 = vpack.c.b16 %v1718, %v1716
    %v1755 = vpack.c.b16 %v1721, %v1719
    %v1756 = vpack.c.b16 %v1722, %v1720
    %v1757 = vpack.c.b16 %v1725, %v1723
    %v1758 = vpack.c.b16 %v1726, %v1724
    %1791 = vmatprep.subr.bf16.mxu0 %v1728
    %1792 = vmatpush1.bf16.msra.mxu0 %v1727
    %1793 = vmatprep.subr.bf16.mxu0 %v1730
    %1794 = vmatpush1.bf16.msra.mxu0 %v1729
    %1795 = vmatprep.subr.bf16.mxu0 %v1732
    %1796 = vmatpush1.bf16.msra.mxu0 %v1731
    %1797 = vmatprep.subr.bf16.mxu0 %v1734
    %1798 = vmatpush1.bf16.msra.mxu0 %v1733
    %1799 = vmatprep.subr.bf16.mxu0 %v1736
    %1800 = vmatpush1.bf16.msra.mxu0 %v1735
    %1801 = vmatprep.subr.bf16.mxu0 %v1738
    %1802 = vmatpush1.bf16.msra.mxu0 %v1737
    %1803 = vmatprep.subr.bf16.mxu0 %v1740
    %1804 = vmatpush1.bf16.msra.mxu0 %v1739
    %1805 = vmatprep.subr.bf16.mxu0 %v1742
    %1806 = vmatpush1.bf16.msra.mxu0 %v1741
    %1807 = vmatprep.subr.bf16.mxu0 %v1744
    %1808 = vmatpush1.bf16.msra.mxu0 %v1743
    %1809 = vmatprep.subr.bf16.mxu0 %v1746
    %1810 = vmatpush1.bf16.msra.mxu0 %v1745
    %1811 = vmatprep.subr.bf16.mxu0 %v1748
    %1812 = vmatpush1.bf16.msra.mxu0 %v1747
    %1813 = vmatprep.subr.bf16.mxu0 %v1750
    %1814 = vmatpush1.bf16.msra.mxu0 %v1749
    %1815 = vmatprep.subr.bf16.mxu0 %v1752
    %1816 = vmatpush1.bf16.msra.mxu0 %v1751
    %1817 = vmatprep.subr.bf16.mxu0 %v1754
    %1818 = vmatpush1.bf16.msra.mxu0 %v1753
    %1819 = vmatprep.subr.bf16.mxu0 %v1756
    %1820 = vmatpush1.bf16.msra.mxu0 %v1755
    %1821 = vmatprep.subr.bf16.mxu0 %v1758
    %1822 = vmatpush1.bf16.msra.mxu0 %v1757
    %1823 = vmatprep.mubr.bf16.mxu0 %v1572
    %1824 = vmatmul.mubr.bf16.gmra.mrb[0].mxu0 %v1571
    %v1825 = vpop.f32.mrb[0].mxu0
    %v1826 = vadd.f32 %v1624, %v1825
    %v1827 = vpop.f32.mrb[0].mxu0
    %v1828 = vadd.f32 %v1628, %v1827
    %v1829 = vpop.f32.mrb[0].mxu0
    %v1830 = vadd.f32 %v1624, %v1829
    %v1831 = vpop.f32.mrb[0].mxu0
    %v1832 = vadd.f32 %v1628, %v1831
    %1833 = vmatprep.mubr.bf16.mxu0 %v1574
    %1834 = vmatmul.mubr.bf16.gmra.mrb[0].mxu0 %v1573
    %v1835 = vpop.f32.mrb[0].mxu0
    %v1836 = vadd.f32 %v1624, %v1835
    %v1837 = vpop.f32.mrb[0].mxu0
    %v1838 = vadd.f32 %v1628, %v1837
    %v1839 = vpop.f32.mrb[0].mxu0
    %v1840 = vadd.f32 %v1624, %v1839
    %v1841 = vpop.f32.mrb[0].mxu0
    %v1842 = vadd.f32 %v1628, %v1841
    %1843 = vmatprep.mubr.bf16.mxu0 %v1576
    %1844 = vmatmul.mubr.bf16.gmra.mrb[0].mxu0 %v1575
    %v1845 = vpop.f32.mrb[0].mxu0
    %v1846 = vadd.f32 %v1624, %v1845
    %v1847 = vpop.f32.mrb[0].mxu0
    %v1848 = vadd.f32 %v1628, %v1847
    %v1849 = vpop.f32.mrb[0].mxu0
    %v1850 = vadd.f32 %v1624, %v1849
    %v1851 = vpop.f32.mrb[0].mxu0
    %v1852 = vadd.f32 %v1628, %v1851
    %1853 = vmatprep.mubr.bf16.mxu0 %v1578
    %1854 = vmatmul.mubr.bf16.gmra.mrb[0].mxu0 %v1577
    %v1855 = vpop.f32.mrb[0].mxu0
    %v1856 = vadd.f32 %v1624, %v1855
    %v1857 = vpop.f32.mrb[0].mxu0
    %v1858 = vadd.f32 %v1628, %v1857
    %v1859 = vpop.f32.mrb[0].mxu0
    %v1860 = vadd.f32 %v1624, %v1859
    %v1861 = vpop.f32.mrb[0].mxu0
    %v1862 = vadd.f32 %v1628, %v1861
    %1863 = vmatprep.mubr.bf16.mxu0 %v1580
    %1864 = vmatmul.mubr.bf16.gmra.mrb[0].mxu0 %v1579
    %v1865 = vpop.f32.mrb[0].mxu0
    %v1866 = vadd.f32 %v1624, %v1865
    %v1867 = vpop.f32.mrb[0].mxu0
    %v1868 = vadd.f32 %v1628, %v1867
    %v1869 = vpop.f32.mrb[0].mxu0
    %v1870 = vadd.f32 %v1624, %v1869
    %v1871 = vpop.f32.mrb[0].mxu0
    %v1872 = vadd.f32 %v1628, %v1871
    %1873 = vmatprep.mubr.bf16.mxu0 %v1582
    %1874 = vmatmul.mubr.bf16.gmra.mrb[0].mxu0 %v1581
    %v1875 = vpop.f32.mrb[0].mxu0
    %v1876 = vadd.f32 %v1624, %v1875
    %v1877 = vpop.f32.mrb[0].mxu0
    %v1878 = vadd.f32 %v1628, %v1877
    %v1879 = vpop.f32.mrb[0].mxu0
    %v1880 = vadd.f32 %v1624, %v1879
    %v1881 = vpop.f32.mrb[0].mxu0
    %v1882 = vadd.f32 %v1628, %v1881
    %1883 = vmatprep.mubr.bf16.mxu0 %v1584
    %1884 = vmatmul.mubr.bf16.gmra.mrb[0].mxu0 %v1583
    %v1885 = vpop.f32.mrb[0].mxu0
    %v1886 = vadd.f32 %v1624, %v1885
    %v1887 = vpop.f32.mrb[0].mxu0
    %v1888 = vadd.f32 %v1628, %v1887
    %v1889 = vpop.f32.mrb[0].mxu0
    %v1890 = vadd.f32 %v1624, %v1889
    %v1891 = vpop.f32.mrb[0].mxu0
    %v1892 = vadd.f32 %v1628, %v1891
    %1893 = vmatprep.mubr.bf16.mxu0 %v1586
    %1894 = vmatmul.mubr.bf16.gmra.mrb[0].mxu0 %v1585
    %v1895 = vpop.f32.mrb[0].mxu0
    %v1896 = vadd.f32 %v1624, %v1895
    %v1897 = vpop.f32.mrb[0].mxu0
    %v1898 = vadd.f32 %v1628, %v1897
    %v1899 = vpop.f32.mrb[0].mxu0
    %v1900 = vadd.f32 %v1624, %v1899
    %v1901 = vpop.f32.mrb[0].mxu0
    %v1902 = vadd.f32 %v1628, %v1901
    %1903 = vdwg.mxu0
    %v1904 = vmax.f32 %v1826, %v1828
    %1905 = vmax.xlane.f32.xlu0 %v1904
    %v1906 = vpop.xlane.xlu0 %1905
    %v1907 = vmax.f32 %v1830, %v1832
    %1908 = vmax.xlane.f32.xlu0 %v1907
    %v1909 = vpop.xlane.xlu0 %1908
    %v1910 = vmax.f32 %v1836, %v1838
    %1911 = vmax.xlane.f32.xlu0 %v1910
    %v1912 = vpop.xlane.xlu0 %1911
    %v1913 = vmax.f32 %v1840, %v1842
    %1914 = vmax.xlane.f32.xlu0 %v1913
    %v1915 = vpop.xlane.xlu0 %1914
    %v1916 = vmax.f32 %v1846, %v1848
    %1917 = vmax.xlane.f32.xlu0 %v1916
    %v1918 = vpop.xlane.xlu0 %1917
    %v1919 = vmax.f32 %v1850, %v1852
    %1920 = vmax.xlane.f32.xlu0 %v1919
    %v1921 = vpop.xlane.xlu0 %1920
    %v1922 = vmax.f32 %v1856, %v1858
    %1923 = vmax.xlane.f32.xlu0 %v1922
    %v1924 = vpop.xlane.xlu0 %1923
    %v1925 = vmax.f32 %v1860, %v1862
    %1926 = vmax.xlane.f32.xlu0 %v1925
    %v1927 = vpop.xlane.xlu0 %1926
    %v1928 = vmax.f32 %v1866, %v1868
    %1929 = vmax.xlane.f32.xlu0 %v1928
    %v1930 = vpop.xlane.xlu0 %1929
    %v1931 = vmax.f32 %v1870, %v1872
    %1932 = vmax.xlane.f32.xlu0 %v1931
    %v1933 = vpop.xlane.xlu0 %1932
    %v1934 = vmax.f32 %v1876, %v1878
    %1935 = vmax.xlane.f32.xlu0 %v1934
    %v1936 = vpop.xlane.xlu0 %1935
    %v1937 = vmax.f32 %v1880, %v1882
    %1938 = vmax.xlane.f32.xlu0 %v1937
    %v1939 = vpop.xlane.xlu0 %1938
    %v1940 = vmax.f32 %v1886, %v1888
    %1941 = vmax.xlane.f32.xlu0 %v1940
    %v1942 = vpop.xlane.xlu0 %1941
    %v1943 = vmax.f32 %v1890, %v1892
    %1944 = vmax.xlane.f32.xlu0 %v1943
    %v1945 = vpop.xlane.xlu0 %1944
    %v1946 = vmax.f32 %v1896, %v1898
    %1947 = vmax.xlane.f32.xlu0 %v1946
    %v1948 = vpop.xlane.xlu0 %1947
    %v1949 = vmax.f32 %v1900, %v1902
    %1950 = vmax.xlane.f32.xlu0 %v1949
    %v1951 = vpop.xlane.xlu0 %1950
    %v1952 = vsub.f32 %v1826, %v1906
    %v1953 = vsub.f32 %v1828, %v1906
    %v1954 = vsub.f32 %v1830, %v1909
    %v1955 = vsub.f32 %v1832, %v1909
    %v1956 = vsub.f32 %v1836, %v1912
    %v1957 = vsub.f32 %v1838, %v1912
    %v1958 = vsub.f32 %v1840, %v1915
    %v1959 = vsub.f32 %v1842, %v1915
    %v1960 = vsub.f32 %v1846, %v1918
    %v1961 = vsub.f32 %v1848, %v1918
    %v1962 = vsub.f32 %v1850, %v1921
    %v1963 = vsub.f32 %v1852, %v1921
    %v1964 = vsub.f32 %v1856, %v1924
    %v1965 = vsub.f32 %v1858, %v1924
    %v1966 = vsub.f32 %v1860, %v1927
    %v1967 = vsub.f32 %v1862, %v1927
    %v1968 = vsub.f32 %v1866, %v1930
    %v1969 = vsub.f32 %v1868, %v1930
    %v1970 = vsub.f32 %v1870, %v1933
    %v1971 = vsub.f32 %v1872, %v1933
    %v1972 = vsub.f32 %v1876, %v1936
    %v1973 = vsub.f32 %v1878, %v1936
    %v1974 = vsub.f32 %v1880, %v1939
    %v1975 = vsub.f32 %v1882, %v1939
    %v1976 = vsub.f32 %v1886, %v1942
    %v1977 = vsub.f32 %v1888, %v1942
    %v1978 = vsub.f32 %v1890, %v1945
    %v1979 = vsub.f32 %v1892, %v1945
    %v1980 = vsub.f32 %v1896, %v1948
    %v1981 = vsub.f32 %v1898, %v1948
    %v1982 = vsub.f32 %v1900, %v1951
    %v1983 = vsub.f32 %v1902, %v1951
    %v1984 = vmul.f32 %v1952, 1.442695
    %v1985 = vpow.pop %v1984
    %v1986 = vmul.f32 %v1953, 1.442695
    %v1987 = vpow.pop %v1986
    %v1988 = vmul.f32 %v1954, 1.442695
    %v1989 = vpow.pop %v1988
    %v1990 = vmul.f32 %v1955, 1.442695
    %v1991 = vpow.pop %v1990
    %v1992 = vmul.f32 %v1956, 1.442695
    %v1993 = vpow.pop %v1992
    %v1994 = vmul.f32 %v1957, 1.442695
    %v1995 = vpow.pop %v1994
    %v1996 = vmul.f32 %v1958, 1.442695
    %v1997 = vpow.pop %v1996
    %v1998 = vmul.f32 %v1959, 1.442695
    %v1999 = vpow.pop %v1998
    %v2000 = vmul.f32 %v1960, 1.442695
    %v2001 = vpow.pop %v2000
    %v2002 = vmul.f32 %v1961, 1.442695
    %v2003 = vpow.pop %v2002
    %v2004 = vmul.f32 %v1962, 1.442695
    %v2005 = vpow.pop %v2004
    %v2006 = vmul.f32 %v1963, 1.442695
    %v2007 = vpow.pop %v2006
    %v2008 = vmul.f32 %v1964, 1.442695
    %v2009 = vpow.pop %v2008
    %v2010 = vmul.f32 %v1965, 1.442695
    %v2011 = vpow.pop %v2010
    %v2012 = vmul.f32 %v1966, 1.442695
    %v2013 = vpow.pop %v2012
    %v2014 = vmul.f32 %v1967, 1.442695
    %v2015 = vpow.pop %v2014
    %v2016 = vmul.f32 %v1968, 1.442695
    %v2017 = vpow.pop %v2016
    %v2018 = vmul.f32 %v1969, 1.442695
    %v2019 = vpow.pop %v2018
    %v2020 = vmul.f32 %v1970, 1.442695
    %v2021 = vpow.pop %v2020
    %v2022 = vmul.f32 %v1971, 1.442695
    %v2023 = vpow.pop %v2022
    %v2024 = vmul.f32 %v1972, 1.442695
    %v2025 = vpow.pop %v2024
    %v2026 = vmul.f32 %v1973, 1.442695
    %v2027 = vpow.pop %v2026
    %v2028 = vmul.f32 %v1974, 1.442695
    %v2029 = vpow.pop %v2028
    %v2030 = vmul.f32 %v1975, 1.442695
    %v2031 = vpow.pop %v2030
    %v2032 = vmul.f32 %v1976, 1.442695
    %v2033 = vpow.pop %v2032
    %v2034 = vmul.f32 %v1977, 1.442695
    %v2035 = vpow.pop %v2034
    %v2036 = vmul.f32 %v1978, 1.442695
    %v2037 = vpow.pop %v2036
    %v2038 = vmul.f32 %v1979, 1.442695
    %v2039 = vpow.pop %v2038
    %v2040 = vmul.f32 %v1980, 1.442695
    %v2041 = vpow.pop %v2040
    %v2042 = vmul.f32 %v1981, 1.442695
    %v2043 = vpow.pop %v2042
    %v2044 = vmul.f32 %v1982, 1.442695
    %v2045 = vpow.pop %v2044
    %v2046 = vmul.f32 %v1983, 1.442695
    %v2047 = vpow.pop %v2046
    %v2048 = vadd.f32 %v1985, %v1987
    %2049 = vadd.xlane.f32.xlu0 %v2048
    %v2050 = vpop.xlane.xlu0 %2049
    %v2051 = vadd.f32 %v1989, %v1991
    %2052 = vadd.xlane.f32.xlu0 %v2051
    %v2053 = vpop.xlane.xlu0 %2052
    %v2054 = vadd.f32 %v1993, %v1995
    %2055 = vadd.xlane.f32.xlu0 %v2054
    %v2056 = vpop.xlane.xlu0 %2055
    %v2057 = vadd.f32 %v1997, %v1999
    %2058 = vadd.xlane.f32.xlu0 %v2057
    %v2059 = vpop.xlane.xlu0 %2058
    %v2060 = vadd.f32 %v2001, %v2003
    %2061 = vadd.xlane.f32.xlu0 %v2060
    %v2062 = vpop.xlane.xlu0 %2061
    %v2063 = vadd.f32 %v2005, %v2007
    %2064 = vadd.xlane.f32.xlu0 %v2063
    %v2065 = vpop.xlane.xlu0 %2064
    %v2066 = vadd.f32 %v2009, %v2011
    %2067 = vadd.xlane.f32.xlu0 %v2066
    %v2068 = vpop.xlane.xlu0 %2067
    %v2069 = vadd.f32 %v2013, %v2015
    %2070 = vadd.xlane.f32.xlu0 %v2069
    %v2071 = vpop.xlane.xlu0 %2070
    %v2072 = vadd.f32 %v2017, %v2019
    %2073 = vadd.xlane.f32.xlu0 %v2072
    %v2074 = vpop.xlane.xlu0 %2073
    %v2075 = vadd.f32 %v2021, %v2023
    %2076 = vadd.xlane.f32.xlu0 %v2075
    %v2077 = vpop.xlane.xlu0 %2076
    %v2078 = vadd.f32 %v2025, %v2027
    %2079 = vadd.xlane.f32.xlu0 %v2078
    %v2080 = vpop.xlane.xlu0 %2079
    %v2081 = vadd.f32 %v2029, %v2031
    %2082 = vadd.xlane.f32.xlu0 %v2081
    %v2083 = vpop.xlane.xlu0 %2082
    %v2084 = vadd.f32 %v2033, %v2035
    %2085 = vadd.xlane.f32.xlu0 %v2084
    %v2086 = vpop.xlane.xlu0 %2085
    %v2087 = vadd.f32 %v2037, %v2039
    %2088 = vadd.xlane.f32.xlu0 %v2087
    %v2089 = vpop.xlane.xlu0 %2088
    %v2090 = vadd.f32 %v2041, %v2043
    %2091 = vadd.xlane.f32.xlu0 %v2090
    %v2092 = vpop.xlane.xlu0 %2091
    %v2093 = vadd.f32 %v2045, %v2047
    %2094 = vadd.xlane.f32.xlu0 %v2093
    %v2095 = vpop.xlane.xlu0 %2094
    %v2096 = vlog2.pop %v2050
    %v2097 = vmul.f32 %v2096, 0.6931472
    %v2098 = vlog2.pop %v2053
    %v2099 = vmul.f32 %v2098, 0.6931472
    %v2100 = vlog2.pop %v2056
    %v2101 = vmul.f32 %v2100, 0.6931472
    %v2102 = vlog2.pop %v2059
    %v2103 = vmul.f32 %v2102, 0.6931472
    %v2104 = vlog2.pop %v2062
    %v2105 = vmul.f32 %v2104, 0.6931472
    %v2106 = vlog2.pop %v2065
    %v2107 = vmul.f32 %v2106, 0.6931472
    %v2108 = vlog2.pop %v2068
    %v2109 = vmul.f32 %v2108, 0.6931472
    %v2110 = vlog2.pop %v2071
    %v2111 = vmul.f32 %v2110, 0.6931472
    %v2112 = vlog2.pop %v2074
    %v2113 = vmul.f32 %v2112, 0.6931472
    %v2114 = vlog2.pop %v2077
    %v2115 = vmul.f32 %v2114, 0.6931472
    %v2116 = vlog2.pop %v2080
    %v2117 = vmul.f32 %v2116, 0.6931472
    %v2118 = vlog2.pop %v2083
    %v2119 = vmul.f32 %v2118, 0.6931472
    %v2120 = vlog2.pop %v2086
    %v2121 = vmul.f32 %v2120, 0.6931472
    %v2122 = vlog2.pop %v2089
    %v2123 = vmul.f32 %v2122, 0.6931472
    %v2124 = vlog2.pop %v2092
    %v2125 = vmul.f32 %v2124, 0.6931472
    %v2126 = vlog2.pop %v2095
    %v2127 = vmul.f32 %v2126, 0.6931472
    %v2128 = vadd.f32 %v1906, %v2097
    %v2129 = vadd.f32 %v1909, %v2099
    %v2130 = vadd.f32 %v1912, %v2101
    %v2131 = vadd.f32 %v1915, %v2103
    %v2132 = vadd.f32 %v1918, %v2105
    %v2133 = vadd.f32 %v1921, %v2107
    %v2134 = vadd.f32 %v1924, %v2109
    %v2135 = vadd.f32 %v1927, %v2111
    %v2136 = vadd.f32 %v1930, %v2113
    %v2137 = vadd.f32 %v1933, %v2115
    %v2138 = vadd.f32 %v1936, %v2117
    %v2139 = vadd.f32 %v1939, %v2119
    %v2140 = vadd.f32 %v1942, %v2121
    %v2141 = vadd.f32 %v1945, %v2123
    %v2142 = vadd.f32 %v1948, %v2125
    %v2143 = vadd.f32 %v1951, %v2127
    %v2144 = vsub.f32 %v1826, %v2128
    %v2145 = vsub.f32 %v1828, %v2128
    %v2146 = vsub.f32 %v1830, %v2129
    %v2147 = vsub.f32 %v1832, %v2129
    %v2148 = vsub.f32 %v1836, %v2130
    %v2149 = vsub.f32 %v1838, %v2130
    %v2150 = vsub.f32 %v1840, %v2131
    %v2151 = vsub.f32 %v1842, %v2131
    %v2152 = vsub.f32 %v1846, %v2132
    %v2153 = vsub.f32 %v1848, %v2132
    %v2154 = vsub.f32 %v1850, %v2133
    %v2155 = vsub.f32 %v1852, %v2133
    %v2156 = vsub.f32 %v1856, %v2134
    %v2157 = vsub.f32 %v1858, %v2134
    %v2158 = vsub.f32 %v1860, %v2135
    %v2159 = vsub.f32 %v1862, %v2135
    %v2160 = vsub.f32 %v1866, %v2136
    %v2161 = vsub.f32 %v1868, %v2136
    %v2162 = vsub.f32 %v1870, %v2137
    %v2163 = vsub.f32 %v1872, %v2137
    %v2164 = vsub.f32 %v1876, %v2138
    %v2165 = vsub.f32 %v1878, %v2138
    %v2166 = vsub.f32 %v1880, %v2139
    %v2167 = vsub.f32 %v1882, %v2139
    %v2168 = vsub.f32 %v1886, %v2140
    %v2169 = vsub.f32 %v1888, %v2140
    %v2170 = vsub.f32 %v1890, %v2141
    %v2171 = vsub.f32 %v1892, %v2141
    %v2172 = vsub.f32 %v1896, %v2142
    %v2173 = vsub.f32 %v1898, %v2142
    %v2174 = vsub.f32 %v1900, %v2143
    %v2175 = vsub.f32 %v1902, %v2143
    %2176 = vst [vmem:[#allocation7] sm:$0xff] %v2144
    %2177 = vst [vmem:[#allocation7 + $0x8] sm:$0xff] %v2145
    %2178 = vst [vmem:[#allocation7 + $0x10] sm:$0xff] %v2146
    %2179 = vst [vmem:[#allocation7 + $0x18] sm:$0xff] %v2147
    %2180 = vst [vmem:[#allocation7 + $0x20] sm:$0xff] %v2148
    %2181 = vst [vmem:[#allocation7 + $0x28] sm:$0xff] %v2149
    %2182 = vst [vmem:[#allocation7 + $0x30] sm:$0xff] %v2150
    %2183 = vst [vmem:[#allocation7 + $0x38] sm:$0xff] %v2151
    %2184 = vst [vmem:[#allocation7 + $0x40] sm:$0xff] %v2152
    %2185 = vst [vmem:[#allocation7 + $0x48] sm:$0xff] %v2153
    %2186 = vst [vmem:[#allocation7 + $0x50] sm:$0xff] %v2154
    %2187 = vst [vmem:[#allocation7 + $0x58] sm:$0xff] %v2155
    %2188 = vst [vmem:[#allocation7 + $0x60] sm:$0xff] %v2156
    %2189 = vst [vmem:[#allocation7 + $0x68] sm:$0xff] %v2157
    %2190 = vst [vmem:[#allocation7 + $0x70] sm:$0xff] %v2158
    %2191 = vst [vmem:[#allocation7 + $0x78] sm:$0xff] %v2159
    %2192 = vst [vmem:[#allocation7 + $0x80] sm:$0xff] %v2160
    %2193 = vst [vmem:[#allocation7 + $0x88] sm:$0xff] %v2161
    %2194 = vst [vmem:[#allocation7 + $0x90] sm:$0xff] %v2162
    %2195 = vst [vmem:[#allocation7 + $0x98] sm:$0xff] %v2163
    %2196 = vst [vmem:[#allocation7 + $0xa0] sm:$0xff] %v2164
    %2197 = vst [vmem:[#allocation7 + $0xa8] sm:$0xff] %v2165
    %2198 = vst [vmem:[#allocation7 + $0xb0] sm:$0xff] %v2166
    %2199 = vst [vmem:[#allocation7 + $0xb8] sm:$0xff] %v2167
    %2200 = vst [vmem:[#allocation7 + $0xc0] sm:$0xff] %v2168
    %2201 = vst [vmem:[#allocation7 + $0xc8] sm:$0xff] %v2169
    %2202 = vst [vmem:[#allocation7 + $0xd0] sm:$0xff] %v2170
    %2203 = vst [vmem:[#allocation7 + $0xd8] sm:$0xff] %v2171
    %2204 = vst [vmem:[#allocation7 + $0xe0] sm:$0xff] %v2172
    %2205 = vst [vmem:[#allocation7 + $0xe8] sm:$0xff] %v2173
    %2206 = vst [vmem:[#allocation7 + $0xf0] sm:$0xff] %v2174
    %2207 = vst [vmem:[#allocation7 + $0xf8] sm:$0xff] %v2175
    // Predicated region
    $region30: #{fnn_forward.1} parent=1 // pred_check
      _
    $region31: #{fnn_forward.1} parent=1 // pred_check_branch
      %2209 = sbr.rel (0) target = $region33
    $region32: #{fnn_forward.1} parent=1 // pred_region
      %s2211 = ssub.s32 4096, 4096
      %2212 = vsyncadd [#allocation4], %s2211
      %s2213 = sshll.u32 [#allocation7], 4
      %s2214 = int_to_ptr.vmem [resolvable:$true] %s2213
      %2219 = dma.vmem_to_hbm [thread:$0]  %s2214, 4096, %s5, [#allocation4], 256, 256, 16
    $region33: #{fnn_forward.1} parent=1 // pred_fallthru
      _
    // Predicated region
    $region34: #{fnn_forward.1} parent=1 // pred_check
      _
    $region35: #{fnn_forward.1} parent=1 // pred_check_branch
      %2221 = sbr.rel (0) target = $region37
    $region36: #{fnn_forward.1} parent=1 // pred_region
      %2222 = dma.done [#allocation4], 4096
    $region37: #{fnn_forward.1} parent=1 // pred_fallthru
      _
    %2223 = vsyncpa [#allocation3], 1
    %2224 = vsyncpa [#allocation6], 1
    %2225 = vsyncpa [#allocation4], 1

</llo_original>
